<compile_context>
chip_gen: v5e
topology: v5e:2x2
jax: 0.10.0
libtpu: 0.0.40
codegen_flags: <defaults>
</compile_context>

<pallas_src>
import jax
import jax.numpy as jnp
from jax.experimental import pallas as pl
from jax.experimental.pallas import tpu as pltpu

INPUT_DIM = 28 * 28   # 784
HIDDEN_DIM = 100
OUTPUT_DIM = 10

HIDDEN_PAD = 128      # 100 -> 128 (zero-padded hidden dim, clean lane layout)
OUTPUT_PAD = 128      # 10  -> 128 (zero-padded output dim, lane-dense stores)

# Fixed batch-tile buckets: at most two distinct Mosaic compiles regardless of
# batch size, while keeping last-tile padding waste low.
_TB_BUCKETS = (256, 512)


def _round_up(x, m):
    return (x + m - 1) // m * m


def _pick_tb(B):
    """Pick a batch tile from the fixed bucket set, minimizing padded rows and
    preferring the larger tile on ties (fewer grid steps, same HBM traffic)."""
    best_tb, best_pad = None, None
    for tb in _TB_BUCKETS:
        bpad = _round_up(B, tb)
        if best_pad is None or bpad < best_pad or (bpad == best_pad and tb > best_tb):
            best_tb, best_pad = tb, bpad
    return best_tb, best_pad


def _mlp_kernel(x_ref, w1_ref, b1_ref, w2_ref, b2_ref, out_ref):
    # fc1: (TB, 784) bf16 @ (784, 128) bf16 -> f32 accumulate on the MXU.
    h = jnp.dot(x_ref[...], w1_ref[...], preferred_element_type=jnp.float32)
    h = jnp.maximum(h + b1_ref[...], 0.0)                     # bias + ReLU in f32
    # fc2: (TB, 128) bf16 @ (128, 128) bf16 -> f32 accumulate.
    o = jnp.dot(h.astype(jnp.bfloat16), w2_ref[...],
                preferred_element_type=jnp.float32)
    out_ref[...] = (o + b2_ref[...]).astype(out_ref.dtype)    # bf16 writeback


def prepare_params(w1, b1, w2, b2):
    """One-time (per parameter update) padding + bf16 cast of the weights.

    w1: (784, 100), b1: (100,), w2: (100, 10), b2: (10,)  — i.e. PyTorch's
    nn.Linear weights transposed to (in, out).  Returns padded/casted tensors
    ready for feedforward_forward, so the per-call path only touches x.
    """
    w1_p = jnp.zeros((INPUT_DIM, HIDDEN_PAD), jnp.float32).at[:, :HIDDEN_DIM].set(w1)
    b1_p = jnp.zeros((1, HIDDEN_PAD), jnp.float32).at[0, :HIDDEN_DIM].set(b1)
    w2_p = jnp.zeros((HIDDEN_PAD, OUTPUT_PAD), jnp.float32).at[:HIDDEN_DIM, :OUTPUT_DIM].set(w2)
    b2_p = jnp.zeros((1, OUTPUT_PAD), jnp.float32).at[0, :OUTPUT_DIM].set(b2)
    return (w1_p.astype(jnp.bfloat16), b1_p, w2_p.astype(jnp.bfloat16), b2_p)


def feedforward_forward(x, prepared_params):
    """x: (B, 784) f32; prepared_params from prepare_params().

    Returns (B, 10) f32 logits, matching fc2(relu(fc1(x))).
    """
    w1_bf, b1_p, w2_bf, b2_p = prepared_params
    B = x.shape[0]

    TB, B_pad = _pick_tb(B)
    grid = (B_pad // TB,)

    # Cast to bf16 FIRST, then zero-pad the batch (single cheap pad op).
    x_bf = x.astype(jnp.bfloat16)
    if B_pad != B:
        x_bf = jnp.pad(x_bf, ((0, B_pad - B), (0, 0)))

    cost = pl.CostEstimate(
        flops=2 * B_pad * (INPUT_DIM * HIDDEN_PAD + HIDDEN_PAD * OUTPUT_PAD),
        bytes_accessed=(B_pad * INPUT_DIM * 2           # x (bf16)
                        + INPUT_DIM * HIDDEN_PAD * 2    # w1 (bf16)
                        + HIDDEN_PAD * OUTPUT_PAD * 2   # w2 (bf16)
                        + HIDDEN_PAD * 4 + OUTPUT_PAD * 4   # biases (f32)
                        + B_pad * OUTPUT_PAD * 2),      # output (bf16)
        transcendentals=0,
    )

    out_padded = pl.pallas_call(
        _mlp_kernel,
        out_shape=jax.ShapeDtypeStruct((B_pad, OUTPUT_PAD), jnp.bfloat16),
        grid=grid,
        in_specs=[
            # x: tiled (double-buffered) over the batch axis.
            pl.BlockSpec((TB, INPUT_DIM), lambda i: (i, 0)),
            # Weights / biases: constant index_map -> resident in VMEM.
            pl.BlockSpec((INPUT_DIM, HIDDEN_PAD), lambda i: (0, 0)),
            pl.BlockSpec((1, HIDDEN_PAD), lambda i: (0, 0)),
            pl.BlockSpec((HIDDEN_PAD, OUTPUT_PAD), lambda i: (0, 0)),
            pl.BlockSpec((1, OUTPUT_PAD), lambda i: (0, 0)),
        ],
        out_specs=pl.BlockSpec((TB, OUTPUT_PAD), lambda i: (i, 0)),
        compiler_params=pltpu.CompilerParams(
            dimension_semantics=("parallel",),
        ),
        cost_estimate=cost,
    )(x_bf, w1_bf, b1_p, w2_bf, b2_p)

    # Slice off batch/lane padding; return f32 logits like the PyTorch module.
    return out_padded[:B, :OUTPUT_DIM].astype(jnp.float32)


def init_params(key):
    """Deterministic init mirroring torch.nn.Linear's U(-1/sqrt(fan_in), 1/sqrt(fan_in))."""
    k1, k2, k3, k4 = jax.random.split(key, 4)
    bound1 = 1.0 / jnp.sqrt(jnp.float32(INPUT_DIM))
    bound2 = 1.0 / jnp.sqrt(jnp.float32(HIDDEN_DIM))
    # Stored as (in, out) — transpose of PyTorch's (out, in) weight layout.
    w1 = jax.random.uniform(k1, (INPUT_DIM, HIDDEN_DIM), jnp.float32, -bound1, bound1)
    b1 = jax.random.uniform(k2, (HIDDEN_DIM,), jnp.float32, -bound1, bound1)
    w2 = jax.random.uniform(k3, (HIDDEN_DIM, OUTPUT_DIM), jnp.float32, -bound2, bound2)
    b2 = jax.random.uniform(k4, (OUTPUT_DIM,), jnp.float32, -bound2, bound2)
    return w1, b1, w2, b2


if __name__ == "__main__":
    key = jax.random.PRNGKey(0)
    kx, kp = jax.random.split(key)

    batch = 8
    x = jax.random.normal(kx, (batch, INPUT_DIM), jnp.float32)
    w1, b1, w2, b2 = init_params(kp)

    # Weight padding / bf16 cast done once, outside the per-call path.
    prepared = prepare_params(w1, b1, w2, b2)

    out = feedforward_forward(x, prepared)
    out = jax.block_until_ready(out)

    # Pure-JAX f32 reference (kernel uses bf16 inputs/output with f32
    # accumulation, so allow a small tolerance).
    ref = jnp.maximum(x @ w1 + b1, 0.0) @ w2 + b2
    assert out.shape == (batch, OUTPUT_DIM)
    assert jnp.allclose(out, ref, atol=3e-2, rtol=3e-2)

    print("KERNEL_OK")
</pallas_src>

<mosaic_0001>
module attributes {stable_mosaic.version = 11 : i64} {
  func.func @_mlp_kernel(%arg0: i32, %arg1: memref<256x784xbf16, #tpu.memory_space<vmem>>, %arg2: memref<784x128xbf16, #tpu.memory_space<vmem>>, %arg3: memref<1x128xf32, #tpu.memory_space<vmem>>, %arg4: memref<128x128xbf16, #tpu.memory_space<vmem>>, %arg5: memref<1x128xf32, #tpu.memory_space<vmem>>, %arg6: memref<256x128xbf16, #tpu.memory_space<vmem>>) attributes {dimension_semantics = [#tpu.dimension_semantics<parallel>], iteration_bounds = array<i64: 1>, scalar_prefetch = 0 : i64, scratch_operands = 0 : i64, tpu.core_type = #tpu.core_type<tc>, window_params = [{transform_indices = @transform_0, window_bounds = array<i64: 256, 784>}, {pipeline_mode = #tpu.pipeline_mode<synchronous>, transform_indices = @transform_1, window_bounds = array<i64: 784, 128>}, {pipeline_mode = #tpu.pipeline_mode<synchronous>, transform_indices = @transform_2, window_bounds = array<i64: 1, 128>}, {pipeline_mode = #tpu.pipeline_mode<synchronous>, transform_indices = @transform_3, window_bounds = array<i64: 128, 128>}, {pipeline_mode = #tpu.pipeline_mode<synchronous>, transform_indices = @transform_4, window_bounds = array<i64: 1, 128>}, {transform_indices = @transform_5, window_bounds = array<i64: 256, 128>}]} {
    %c0 = arith.constant 0 : index
    %c0_0 = arith.constant 0 : index
    %0 = vector.load %arg1[%c0, %c0_0] : memref<256x784xbf16, #tpu.memory_space<vmem>>, vector<256x784xbf16>
    %c0_1 = arith.constant 0 : index
    %c0_2 = arith.constant 0 : index
    %1 = vector.load %arg2[%c0_1, %c0_2] : memref<784x128xbf16, #tpu.memory_space<vmem>>, vector<784x128xbf16>
    %cst = arith.constant dense<0.000000e+00> : vector<256x128xf32>
    %2 = tpu.matmul %0, %1, %cst {dimension_numbers = #tpu.dot_dimension_numbers<[1], [0], [0], [1], [0, 0, 1, 1], [], []>} : vector<256x784xbf16>, vector<784x128xbf16>, vector<256x128xf32> -> vector<256x128xf32>
    %c0_3 = arith.constant 0 : index
    %c0_4 = arith.constant 0 : index
    %3 = vector.load %arg3[%c0_3, %c0_4] : memref<1x128xf32, #tpu.memory_space<vmem>>, vector<1x128xf32>
    %4 = vector.broadcast %3 : vector<1x128xf32> to vector<256x128xf32>
    %5 = arith.addf %2, %4 : vector<256x128xf32>
    %cst_5 = arith.constant 0.000000e+00 : f32
    %6 = vector.broadcast %cst_5 : f32 to vector<256x128xf32>
    %7 = arith.maximumf %5, %6 : vector<256x128xf32>
    %8 = arith.truncf %7 : vector<256x128xf32> to vector<256x128xbf16>
    %c0_6 = arith.constant 0 : index
    %c0_7 = arith.constant 0 : index
    %9 = vector.load %arg4[%c0_6, %c0_7] : memref<128x128xbf16, #tpu.memory_space<vmem>>, vector<128x128xbf16>
    %cst_8 = arith.constant dense<0.000000e+00> : vector<256x128xf32>
    %10 = tpu.matmul %8, %9, %cst_8 {dimension_numbers = #tpu.dot_dimension_numbers<[1], [0], [0], [1], [0, 0, 1, 1], [], []>} : vector<256x128xbf16>, vector<128x128xbf16>, vector<256x128xf32> -> vector<256x128xf32>
    %c0_9 = arith.constant 0 : index
    %c0_10 = arith.constant 0 : index
    %11 = vector.load %arg5[%c0_9, %c0_10] : memref<1x128xf32, #tpu.memory_space<vmem>>, vector<1x128xf32>
    %12 = vector.broadcast %11 : vector<1x128xf32> to vector<256x128xf32>
    %13 = arith.addf %10, %12 : vector<256x128xf32>
    %14 = arith.truncf %13 : vector<256x128xf32> to vector<256x128xbf16>
    %c0_11 = arith.constant 0 : index
    %c0_12 = arith.constant 0 : index
    %15 = vector.load %arg6[%c0_11, %c0_12] : memref<256x128xbf16, #tpu.memory_space<vmem>>, vector<256x128xbf16>
    tpu.vector_store %arg6[%c0_11, %c0_12], %14 {strides = array<i32>} : memref<256x128xbf16, #tpu.memory_space<vmem>>, vector<256x128xbf16>,
    return
  }
  func.func @transform_0(%arg0: i32) -> (i32, i32) {
    %c0_i32 = arith.constant 0 : i32
    %c0_i32_0 = arith.constant 0 : i32
    return %arg0, %c0_i32 : i32, i32
  }
  func.func @transform_1(%arg0: i32) -> (i32, i32) {
    %c0_i32 = arith.constant 0 : i32
    %c0_i32_0 = arith.constant 0 : i32
    %c0_i32_1 = arith.constant 0 : i32
    return %c0_i32, %c0_i32_0 : i32, i32
  }
  func.func @transform_2(%arg0: i32) -> (i32, i32) {
    %c0_i32 = arith.constant 0 : i32
    %c0_i32_0 = arith.constant 0 : i32
    %c0_i32_1 = arith.constant 0 : i32
    return %c0_i32, %c0_i32_0 : i32, i32
  }
  func.func @transform_3(%arg0: i32) -> (i32, i32) {
    %c0_i32 = arith.constant 0 : i32
    %c0_i32_0 = arith.constant 0 : i32
    %c0_i32_1 = arith.constant 0 : i32
    return %c0_i32, %c0_i32_0 : i32, i32
  }
  func.func @transform_4(%arg0: i32) -> (i32, i32) {
    %c0_i32 = arith.constant 0 : i32
    %c0_i32_0 = arith.constant 0 : i32
    %c0_i32_1 = arith.constant 0 : i32
    return %c0_i32, %c0_i32_0 : i32, i32
  }
  func.func @transform_5(%arg0: i32) -> (i32, i32) {
    %c0_i32 = arith.constant 0 : i32
    %c0_i32_0 = arith.constant 0 : i32
    return %arg0, %c0_i32 : i32, i32
  }
}

</mosaic_0001>

<llo_original>
// kernel: tpu_custom_call.1
$region0: #{tpu_custom_call.1}
  #allocation0 [shape = 'u32[]', space=smem, size = 0x4, offset = 0x4, fixed_abs, tag = 'smem constant byte address 0x4 - core index']
  #allocation1 [shape = 'u32[72,128]{1,0:T(1,128)}', space=vmem, size = 0x9000, scoped, tag = 'internal scratch']
  %s0 = inlined_call_operand.vmem [shape: bf16[256,784], index: 0, kind: input, shape index: {}]
  %s1 = inlined_call_operand.vmem [shape: bf16[784,128], index: 1, kind: input, shape index: {}]
  %s2 = inlined_call_operand.vmem [shape: f32[1,128], index: 2, kind: input, shape index: {}]
  %s3 = inlined_call_operand.vmem [shape: bf16[128,128], index: 3, kind: input, shape index: {}]
  %s4 = inlined_call_operand.vmem [shape: f32[1,128], index: 4, kind: input, shape index: {}]
  %s5 = inlined_call_operand.hbm [shape: bf16[256,128], index: 5, kind: output, shape index: {}]
  %s6 = sld [smem:[#allocation0]]
  $region30: #{tpu_custom_call.1} parent=0
    _
  %s8 = ssub.s32 1, %s6
  %s9 = scalar_select 0, %s8, %s6
  $region1: #{tpu_custom_call.1} parent=0
    #allocation2 [shape = 'u8[65536]{0}', space=vmem, size = 0x10000, scoped, tag = 'output window, operand 0, single buffered']
    #allocation3 [shape = 's32[1]{0}', space=sflag, size = 0x4, scoped, tag = 'scoped memory for tpu_custom_call.1']
    %10 = vsyncpa [#allocation3], 0
    // Predicated region
    $region2: #{tpu_custom_call.1} parent=1 // pred_check
      _
    $region3: #{tpu_custom_call.1} parent=1 // pred_check_branch
      %12 = sbr.rel (0) target = $region5
    $region4: #{tpu_custom_call.1} parent=1 // pred_region
      _
    $region5: #{tpu_custom_call.1} parent=1 // pred_fallthru
      _
    // Predicated region
    $region6: #{tpu_custom_call.1} parent=1 // pred_check
      _
    $region7: #{tpu_custom_call.1} parent=1 // pred_check_branch
      %14 = sbr.rel (0) target = $region9
    $region8: #{tpu_custom_call.1} parent=1 // pred_region
      _
    $region9: #{tpu_custom_call.1} parent=1 // pred_fallthru
      _
    // Predicated region
    $region10: #{tpu_custom_call.1} parent=1 // pred_check
      _
    $region11: #{tpu_custom_call.1} parent=1 // pred_check_branch
      %16 = sbr.rel (0) target = $region13
    $region12: #{tpu_custom_call.1} parent=1 // pred_region
      _
    $region13: #{tpu_custom_call.1} parent=1 // pred_fallthru
      _
    // Predicated region
    $region14: #{tpu_custom_call.1} parent=1 // pred_check
      _
    $region15: #{tpu_custom_call.1} parent=1 // pred_check_branch
      %18 = sbr.rel (0) target = $region17
    $region16: #{tpu_custom_call.1} parent=1 // pred_region
      _
    $region17: #{tpu_custom_call.1} parent=1 // pred_fallthru
      _
    // Predicated region
    $region18: #{tpu_custom_call.1} parent=1 // pred_check
      _
    $region19: #{tpu_custom_call.1} parent=1 // pred_check_branch
      %20 = sbr.rel (0) target = $region21
    $region20: #{tpu_custom_call.1} parent=1 // pred_region
      _
    $region21: #{tpu_custom_call.1} parent=1 // pred_fallthru
      _
    %v22 = vld [vmem:[%s0] sm:$0xff]
    %v23 = vld [vmem:[%s0 + $0x8] sm:$0xff]
    %v24 = vld [vmem:[%s0 + $0x10] sm:$0xff]
    %v25 = vld [vmem:[%s0 + $0x18] sm:$0xf]
    %v26 = vld [vmem:[%s0 + $0x1c] sm:$0xff]
    %v27 = vld [vmem:[%s0 + $0x24] sm:$0xff]
    %v28 = vld [vmem:[%s0 + $0x2c] sm:$0xff]
    %v29 = vld [vmem:[%s0 + $0x34] sm:$0xf]
    %v30 = vld [vmem:[%s0 + $0x38] sm:$0xff]
    %v31 = vld [vmem:[%s0 + $0x40] sm:$0xff]
    %v32 = vld [vmem:[%s0 + $0x48] sm:$0xff]
    %v33 = vld [vmem:[%s0 + $0x50] sm:$0xf]
    %v34 = vld [vmem:[%s0 + $0x54] sm:$0xff]
    %v35 = vld [vmem:[%s0 + $0x5c] sm:$0xff]
    %v36 = vld [vmem:[%s0 + $0x64] sm:$0xff]
    %v37 = vld [vmem:[%s0 + $0x6c] sm:$0xf]
    %v38 = vld [vmem:[%s0 + $0x70] sm:$0xff]
    %v39 = vld [vmem:[%s0 + $0x78] sm:$0xff]
    %v40 = vld [vmem:[%s0 + $0x80] sm:$0xff]
    %v41 = vld [vmem:[%s0 + $0x88] sm:$0xf]
    %v42 = vld [vmem:[%s0 + $0x8c] sm:$0xff]
    %v43 = vld [vmem:[%s0 + $0x94] sm:$0xff]
    %v44 = vld [vmem:[%s0 + $0x9c] sm:$0xff]
    %v45 = vld [vmem:[%s0 + $0xa4] sm:$0xf]
    %v46 = vld [vmem:[%s0 + $0xa8] sm:$0xff]
    %v47 = vld [vmem:[%s0 + $0xb0] sm:$0xff]
    %v48 = vld [vmem:[%s0 + $0xb8] sm:$0xff]
    %v49 = vld [vmem:[%s0 + $0xc0] sm:$0xf]
    %v50 = vld [vmem:[%s0 + $0xc4] sm:$0xff]
    %v51 = vld [vmem:[%s0 + $0xcc] sm:$0xff]
    %v52 = vld [vmem:[%s0 + $0xd4] sm:$0xff]
    %v53 = vld [vmem:[%s0 + $0xdc] sm:$0xf]
    %v54 = vld [vmem:[%s0 + $0xe0] sm:$0xff]
    %v55 = vld [vmem:[%s0 + $0xe8] sm:$0xff]
    %v56 = vld [vmem:[%s0 + $0xf0] sm:$0xff]
    %v57 = vld [vmem:[%s0 + $0xf8] sm:$0xf]
    %v58 = vld [vmem:[%s0 + $0xfc] sm:$0xff]
    %v59 = vld [vmem:[%s0 + $0x104] sm:$0xff]
    %v60 = vld [vmem:[%s0 + $0x10c] sm:$0xff]
    %v61 = vld [vmem:[%s0 + $0x114] sm:$0xf]
    %v62 = vld [vmem:[%s0 + $0x118] sm:$0xff]
    %v63 = vld [vmem:[%s0 + $0x120] sm:$0xff]
    %v64 = vld [vmem:[%s0 + $0x128] sm:$0xff]
    %v65 = vld [vmem:[%s0 + $0x130] sm:$0xf]
    %v66 = vld [vmem:[%s0 + $0x134] sm:$0xff]
    %v67 = vld [vmem:[%s0 + $0x13c] sm:$0xff]
    %v68 = vld [vmem:[%s0 + $0x144] sm:$0xff]
    %v69 = vld [vmem:[%s0 + $0x14c] sm:$0xf]
    %v70 = vld [vmem:[%s0 + $0x150] sm:$0xff]
    %v71 = vld [vmem:[%s0 + $0x158] sm:$0xff]
    %v72 = vld [vmem:[%s0 + $0x160] sm:$0xff]
    %v73 = vld [vmem:[%s0 + $0x168] sm:$0xf]
    %v74 = vld [vmem:[%s0 + $0x16c] sm:$0xff]
    %v75 = vld [vmem:[%s0 + $0x174] sm:$0xff]
    %v76 = vld [vmem:[%s0 + $0x17c] sm:$0xff]
    %v77 = vld [vmem:[%s0 + $0x184] sm:$0xf]
    %v78 = vld [vmem:[%s0 + $0x188] sm:$0xff]
    %v79 = vld [vmem:[%s0 + $0x190] sm:$0xff]
    %v80 = vld [vmem:[%s0 + $0x198] sm:$0xff]
    %v81 = vld [vmem:[%s0 + $0x1a0] sm:$0xf]
    %v82 = vld [vmem:[%s0 + $0x1a4] sm:$0xff]
    %v83 = vld [vmem:[%s0 + $0x1ac] sm:$0xff]
    %v84 = vld [vmem:[%s0 + $0x1b4] sm:$0xff]
    %v85 = vld [vmem:[%s0 + $0x1bc] sm:$0xf]
    %v86 = vld [vmem:[%s0 + $0x1c0] sm:$0xff]
    %v87 = vld [vmem:[%s0 + $0x1c8] sm:$0xff]
    %v88 = vld [vmem:[%s0 + $0x1d0] sm:$0xff]
    %v89 = vld [vmem:[%s0 + $0x1d8] sm:$0xf]
    %v90 = vld [vmem:[%s0 + $0x1dc] sm:$0xff]
    %v91 = vld [vmem:[%s0 + $0x1e4] sm:$0xff]
    %v92 = vld [vmem:[%s0 + $0x1ec] sm:$0xff]
    %v93 = vld [vmem:[%s0 + $0x1f4] sm:$0xf]
    %v94 = vld [vmem:[%s0 + $0x1f8] sm:$0xff]
    %v95 = vld [vmem:[%s0 + $0x200] sm:$0xff]
    %v96 = vld [vmem:[%s0 + $0x208] sm:$0xff]
    %v97 = vld [vmem:[%s0 + $0x210] sm:$0xf]
    %v98 = vld [vmem:[%s0 + $0x214] sm:$0xff]
    %v99 = vld [vmem:[%s0 + $0x21c] sm:$0xff]
    %v100 = vld [vmem:[%s0 + $0x224] sm:$0xff]
    %v101 = vld [vmem:[%s0 + $0x22c] sm:$0xf]
    %v102 = vld [vmem:[%s0 + $0x230] sm:$0xff]
    %v103 = vld [vmem:[%s0 + $0x238] sm:$0xff]
    %v104 = vld [vmem:[%s0 + $0x240] sm:$0xff]
    %v105 = vld [vmem:[%s0 + $0x248] sm:$0xf]
    %v106 = vld [vmem:[%s0 + $0x24c] sm:$0xff]
    %v107 = vld [vmem:[%s0 + $0x254] sm:$0xff]
    %v108 = vld [vmem:[%s0 + $0x25c] sm:$0xff]
    %v109 = vld [vmem:[%s0 + $0x264] sm:$0xf]
    %v110 = vld [vmem:[%s0 + $0x268] sm:$0xff]
    %v111 = vld [vmem:[%s0 + $0x270] sm:$0xff]
    %v112 = vld [vmem:[%s0 + $0x278] sm:$0xff]
    %v113 = vld [vmem:[%s0 + $0x280] sm:$0xf]
    %v114 = vld [vmem:[%s0 + $0x284] sm:$0xff]
    %v115 = vld [vmem:[%s0 + $0x28c] sm:$0xff]
    %v116 = vld [vmem:[%s0 + $0x294] sm:$0xff]
    %v117 = vld [vmem:[%s0 + $0x29c] sm:$0xf]
    %v118 = vld [vmem:[%s0 + $0x2a0] sm:$0xff]
    %v119 = vld [vmem:[%s0 + $0x2a8] sm:$0xff]
    %v120 = vld [vmem:[%s0 + $0x2b0] sm:$0xff]
    %v121 = vld [vmem:[%s0 + $0x2b8] sm:$0xf]
    %v122 = vld [vmem:[%s0 + $0x2bc] sm:$0xff]
    %v123 = vld [vmem:[%s0 + $0x2c4] sm:$0xff]
    %v124 = vld [vmem:[%s0 + $0x2cc] sm:$0xff]
    %v125 = vld [vmem:[%s0 + $0x2d4] sm:$0xf]
    %v126 = vld [vmem:[%s0 + $0x2d8] sm:$0xff]
    %v127 = vld [vmem:[%s0 + $0x2e0] sm:$0xff]
    %v128 = vld [vmem:[%s0 + $0x2e8] sm:$0xff]
    %v129 = vld [vmem:[%s0 + $0x2f0] sm:$0xf]
    %v130 = vld [vmem:[%s0 + $0x2f4] sm:$0xff]
    %v131 = vld [vmem:[%s0 + $0x2fc] sm:$0xff]
    %v132 = vld [vmem:[%s0 + $0x304] sm:$0xff]
    %v133 = vld [vmem:[%s0 + $0x30c] sm:$0xf]
    %v134 = vld [vmem:[%s0 + $0x310] sm:$0xff]
    %v135 = vld [vmem:[%s0 + $0x318] sm:$0xff]
    %v136 = vld [vmem:[%s0 + $0x320] sm:$0xff]
    %v137 = vld [vmem:[%s0 + $0x328] sm:$0xf]
    %v138 = vld [vmem:[%s0 + $0x32c] sm:$0xff]
    %v139 = vld [vmem:[%s0 + $0x334] sm:$0xff]
    %v140 = vld [vmem:[%s0 + $0x33c] sm:$0xff]
    %v141 = vld [vmem:[%s0 + $0x344] sm:$0xf]
    %v142 = vld [vmem:[%s0 + $0x348] sm:$0xff]
    %v143 = vld [vmem:[%s0 + $0x350] sm:$0xff]
    %v144 = vld [vmem:[%s0 + $0x358] sm:$0xff]
    %v145 = vld [vmem:[%s0 + $0x360] sm:$0xf]
    %v146 = vld [vmem:[%s0 + $0x364] sm:$0xff]
    %v147 = vld [vmem:[%s0 + $0x36c] sm:$0xff]
    %v148 = vld [vmem:[%s0 + $0x374] sm:$0xff]
    %v149 = vld [vmem:[%s0 + $0x37c] sm:$0xf]
    %v150 = vld [vmem:[%s1] sm:$0xf]
    %v151 = vld [vmem:[%s1 + $0x4] sm:$0xf]
    %v152 = vld [vmem:[%s1 + $0x8] sm:$0xf]
    %v153 = vld [vmem:[%s1 + $0xc] sm:$0xf]
    %v154 = vld [vmem:[%s1 + $0x10] sm:$0xf]
    %v155 = vld [vmem:[%s1 + $0x14] sm:$0xf]
    %v156 = vld [vmem:[%s1 + $0x18] sm:$0xf]
    %v157 = vld [vmem:[%s1 + $0x1c] sm:$0xf]
    %v158 = vld [vmem:[%s1 + $0x20] sm:$0xf]
    %v159 = vld [vmem:[%s1 + $0x24] sm:$0xf]
    %v160 = vld [vmem:[%s1 + $0x28] sm:$0xf]
    %v161 = vld [vmem:[%s1 + $0x2c] sm:$0xf]
    %v162 = vld [vmem:[%s1 + $0x30] sm:$0xf]
    %v163 = vld [vmem:[%s1 + $0x34] sm:$0xf]
    %v164 = vld [vmem:[%s1 + $0x38] sm:$0xf]
    %v165 = vld [vmem:[%s1 + $0x3c] sm:$0xf]
    %v166 = vld [vmem:[%s1 + $0x40] sm:$0xf]
    %v167 = vld [vmem:[%s1 + $0x44] sm:$0xf]
    %v168 = vld [vmem:[%s1 + $0x48] sm:$0xf]
    %v169 = vld [vmem:[%s1 + $0x4c] sm:$0xf]
    %v170 = vld [vmem:[%s1 + $0x50] sm:$0xf]
    %v171 = vld [vmem:[%s1 + $0x54] sm:$0xf]
    %v172 = vld [vmem:[%s1 + $0x58] sm:$0xf]
    %v173 = vld [vmem:[%s1 + $0x5c] sm:$0xf]
    %v174 = vld [vmem:[%s1 + $0x60] sm:$0xf]
    %v175 = vld [vmem:[%s1 + $0x64] sm:$0xf]
    %v176 = vld [vmem:[%s1 + $0x68] sm:$0xf]
    %v177 = vld [vmem:[%s1 + $0x6c] sm:$0xf]
    %v178 = vld [vmem:[%s1 + $0x70] sm:$0xf]
    %v179 = vld [vmem:[%s1 + $0x74] sm:$0xf]
    %v180 = vld [vmem:[%s1 + $0x78] sm:$0xf]
    %v181 = vld [vmem:[%s1 + $0x7c] sm:$0xf]
    %v182 = vld [vmem:[%s1 + $0x80] sm:$0xf]
    %v183 = vld [vmem:[%s1 + $0x84] sm:$0xf]
    %v184 = vld [vmem:[%s1 + $0x88] sm:$0xf]
    %v185 = vld [vmem:[%s1 + $0x8c] sm:$0xf]
    %v186 = vld [vmem:[%s1 + $0x90] sm:$0xf]
    %v187 = vld [vmem:[%s1 + $0x94] sm:$0xf]
    %v188 = vld [vmem:[%s1 + $0x98] sm:$0xf]
    %v189 = vld [vmem:[%s1 + $0x9c] sm:$0xf]
    %v190 = vld [vmem:[%s1 + $0xa0] sm:$0xf]
    %v191 = vld [vmem:[%s1 + $0xa4] sm:$0xf]
    %v192 = vld [vmem:[%s1 + $0xa8] sm:$0xf]
    %v193 = vld [vmem:[%s1 + $0xac] sm:$0xf]
    %v194 = vld [vmem:[%s1 + $0xb0] sm:$0xf]
    %v195 = vld [vmem:[%s1 + $0xb4] sm:$0xf]
    %v196 = vld [vmem:[%s1 + $0xb8] sm:$0xf]
    %v197 = vld [vmem:[%s1 + $0xbc] sm:$0xf]
    %v198 = vld [vmem:[%s1 + $0xc0] sm:$0xf]
    %v199 = vld [vmem:[%s1 + $0xc4] sm:$0xf]
    %v200 = vld [vmem:[%s1 + $0xc8] sm:$0xf]
    %v201 = vld [vmem:[%s1 + $0xcc] sm:$0xf]
    %v202 = vld [vmem:[%s1 + $0xd0] sm:$0xf]
    %v203 = vld [vmem:[%s1 + $0xd4] sm:$0xf]
    %v204 = vld [vmem:[%s1 + $0xd8] sm:$0xf]
    %v205 = vld [vmem:[%s1 + $0xdc] sm:$0xf]
    %v206 = vld [vmem:[%s1 + $0xe0] sm:$0xf]
    %v207 = vld [vmem:[%s1 + $0xe4] sm:$0xf]
    %v208 = vld [vmem:[%s1 + $0xe8] sm:$0xf]
    %v209 = vld [vmem:[%s1 + $0xec] sm:$0xf]
    %v210 = vld [vmem:[%s1 + $0xf0] sm:$0xf]
    %v211 = vld [vmem:[%s1 + $0xf4] sm:$0xf]
    %v212 = vld [vmem:[%s1 + $0xf8] sm:$0xf]
    %v213 = vld [vmem:[%s1 + $0xfc] sm:$0xf]
    %v214 = vld [vmem:[%s1 + $0x100] sm:$0xf]
    %v215 = vld [vmem:[%s1 + $0x104] sm:$0xf]
    %v216 = vld [vmem:[%s1 + $0x108] sm:$0xf]
    %v217 = vld [vmem:[%s1 + $0x10c] sm:$0xf]
    %v218 = vld [vmem:[%s1 + $0x110] sm:$0xf]
    %v219 = vld [vmem:[%s1 + $0x114] sm:$0xf]
    %v220 = vld [vmem:[%s1 + $0x118] sm:$0xf]
    %v221 = vld [vmem:[%s1 + $0x11c] sm:$0xf]
    %v222 = vld [vmem:[%s1 + $0x120] sm:$0xf]
    %v223 = vld [vmem:[%s1 + $0x124] sm:$0xf]
    %v224 = vld [vmem:[%s1 + $0x128] sm:$0xf]
    %v225 = vld [vmem:[%s1 + $0x12c] sm:$0xf]
    %v226 = vld [vmem:[%s1 + $0x130] sm:$0xf]
    %v227 = vld [vmem:[%s1 + $0x134] sm:$0xf]
    %v228 = vld [vmem:[%s1 + $0x138] sm:$0xf]
    %v229 = vld [vmem:[%s1 + $0x13c] sm:$0xf]
    %v230 = vld [vmem:[%s1 + $0x140] sm:$0xf]
    %v231 = vld [vmem:[%s1 + $0x144] sm:$0xf]
    %v232 = vld [vmem:[%s1 + $0x148] sm:$0xf]
    %v233 = vld [vmem:[%s1 + $0x14c] sm:$0xf]
    %v234 = vld [vmem:[%s1 + $0x150] sm:$0xf]
    %v235 = vld [vmem:[%s1 + $0x154] sm:$0xf]
    %v236 = vld [vmem:[%s1 + $0x158] sm:$0xf]
    %v237 = vld [vmem:[%s1 + $0x15c] sm:$0xf]
    %v238 = vld [vmem:[%s1 + $0x160] sm:$0xf]
    %v239 = vld [vmem:[%s1 + $0x164] sm:$0xf]
    %v240 = vld [vmem:[%s1 + $0x168] sm:$0xf]
    %v241 = vld [vmem:[%s1 + $0x16c] sm:$0xf]
    %v242 = vld [vmem:[%s1 + $0x170] sm:$0xf]
    %v243 = vld [vmem:[%s1 + $0x174] sm:$0xf]
    %v244 = vld [vmem:[%s1 + $0x178] sm:$0xf]
    %v245 = vld [vmem:[%s1 + $0x17c] sm:$0xf]
    %v246 = vld [vmem:[%s1 + $0x180] sm:$0xf]
    %v247 = vld [vmem:[%s1 + $0x184] sm:$0xf]
    %v248 = vld [vmem:[%s2] sm:$0x1]
    %v250 = vperm.slane %v248, 0
    %v380 = vunpack.c.l.b16 %v22
    %v381 = vunpack.c.h.b16 %v22
    %v382 = vunpack.c.l.b16 %v23
    %v383 = vunpack.c.h.b16 %v23
    %v384 = vunpack.c.l.b16 %v24
    %v385 = vunpack.c.h.b16 %v24
    %v386 = vunpack.c.l.b16 %v25
    %v387 = vunpack.c.l.b16 %v26
    %v388 = vunpack.c.h.b16 %v26
    %v389 = vunpack.c.l.b16 %v27
    %v390 = vunpack.c.h.b16 %v27
    %v391 = vunpack.c.l.b16 %v28
    %v392 = vunpack.c.h.b16 %v28
    %v393 = vunpack.c.l.b16 %v29
    %v394 = vunpack.c.l.b16 %v30
    %v395 = vunpack.c.h.b16 %v30
    %v396 = vunpack.c.l.b16 %v31
    %v397 = vunpack.c.h.b16 %v31
    %v398 = vunpack.c.l.b16 %v32
    %v399 = vunpack.c.h.b16 %v32
    %v400 = vunpack.c.l.b16 %v33
    %v401 = vunpack.c.l.b16 %v34
    %v402 = vunpack.c.h.b16 %v34
    %v403 = vunpack.c.l.b16 %v35
    %v404 = vunpack.c.h.b16 %v35
    %v405 = vunpack.c.l.b16 %v36
    %v406 = vunpack.c.h.b16 %v36
    %v407 = vunpack.c.l.b16 %v37
    %v408 = vunpack.c.l.b16 %v38
    %v409 = vunpack.c.h.b16 %v38
    %v410 = vunpack.c.l.b16 %v39
    %v411 = vunpack.c.h.b16 %v39
    %v412 = vunpack.c.l.b16 %v40
    %v413 = vunpack.c.h.b16 %v40
    %v414 = vunpack.c.l.b16 %v41
    %v415 = vunpack.c.l.b16 %v42
    %v416 = vunpack.c.h.b16 %v42
    %v417 = vunpack.c.l.b16 %v43
    %v418 = vunpack.c.h.b16 %v43
    %v419 = vunpack.c.l.b16 %v44
    %v420 = vunpack.c.h.b16 %v44
    %v421 = vunpack.c.l.b16 %v45
    %v422 = vunpack.c.l.b16 %v46
    %v423 = vunpack.c.h.b16 %v46
    %v424 = vunpack.c.l.b16 %v47
    %v425 = vunpack.c.h.b16 %v47
    %v426 = vunpack.c.l.b16 %v48
    %v427 = vunpack.c.h.b16 %v48
    %v428 = vunpack.c.l.b16 %v49
    %v429 = vunpack.c.l.b16 %v50
    %v430 = vunpack.c.h.b16 %v50
    %v431 = vunpack.c.l.b16 %v51
    %v432 = vunpack.c.h.b16 %v51
    %v433 = vunpack.c.l.b16 %v52
    %v434 = vunpack.c.h.b16 %v52
    %v435 = vunpack.c.l.b16 %v53
    %v436 = vunpack.c.l.b16 %v54
    %v437 = vunpack.c.h.b16 %v54
    %v438 = vunpack.c.l.b16 %v55
    %v439 = vunpack.c.h.b16 %v55
    %v440 = vunpack.c.l.b16 %v56
    %v441 = vunpack.c.h.b16 %v56
    %v442 = vunpack.c.l.b16 %v57
    %v443 = vunpack.c.l.b16 %v58
    %v444 = vunpack.c.h.b16 %v58
    %v445 = vunpack.c.l.b16 %v59
    %v446 = vunpack.c.h.b16 %v59
    %v447 = vunpack.c.l.b16 %v60
    %v448 = vunpack.c.h.b16 %v60
    %v449 = vunpack.c.l.b16 %v61
    %v450 = vunpack.c.l.b16 %v62
    %v451 = vunpack.c.h.b16 %v62
    %v452 = vunpack.c.l.b16 %v63
    %v453 = vunpack.c.h.b16 %v63
    %v454 = vunpack.c.l.b16 %v64
    %v455 = vunpack.c.h.b16 %v64
    %v456 = vunpack.c.l.b16 %v65
    %v457 = vunpack.c.l.b16 %v66
    %v458 = vunpack.c.h.b16 %v66
    %v459 = vunpack.c.l.b16 %v67
    %v460 = vunpack.c.h.b16 %v67
    %v461 = vunpack.c.l.b16 %v68
    %v462 = vunpack.c.h.b16 %v68
    %v463 = vunpack.c.l.b16 %v69
    %v464 = vunpack.c.l.b16 %v70
    %v465 = vunpack.c.h.b16 %v70
    %v466 = vunpack.c.l.b16 %v71
    %v467 = vunpack.c.h.b16 %v71
    %v468 = vunpack.c.l.b16 %v72
    %v469 = vunpack.c.h.b16 %v72
    %v470 = vunpack.c.l.b16 %v73
    %v471 = vunpack.c.l.b16 %v74
    %v472 = vunpack.c.h.b16 %v74
    %v473 = vunpack.c.l.b16 %v75
    %v474 = vunpack.c.h.b16 %v75
    %v475 = vunpack.c.l.b16 %v76
    %v476 = vunpack.c.h.b16 %v76
    %v477 = vunpack.c.l.b16 %v77
    %v478 = vunpack.c.l.b16 %v78
    %v479 = vunpack.c.h.b16 %v78
    %v480 = vunpack.c.l.b16 %v79
    %v481 = vunpack.c.h.b16 %v79
    %v482 = vunpack.c.l.b16 %v80
    %v483 = vunpack.c.h.b16 %v80
    %v484 = vunpack.c.l.b16 %v81
    %v485 = vunpack.c.l.b16 %v82
    %v486 = vunpack.c.h.b16 %v82
    %v487 = vunpack.c.l.b16 %v83
    %v488 = vunpack.c.h.b16 %v83
    %v489 = vunpack.c.l.b16 %v84
    %v490 = vunpack.c.h.b16 %v84
    %v491 = vunpack.c.l.b16 %v85
    %v492 = vunpack.c.l.b16 %v86
    %v493 = vunpack.c.h.b16 %v86
    %v494 = vunpack.c.l.b16 %v87
    %v495 = vunpack.c.h.b16 %v87
    %v496 = vunpack.c.l.b16 %v88
    %v497 = vunpack.c.h.b16 %v88
    %v498 = vunpack.c.l.b16 %v89
    %v499 = vunpack.c.l.b16 %v90
    %v500 = vunpack.c.h.b16 %v90
    %v501 = vunpack.c.l.b16 %v91
    %v502 = vunpack.c.h.b16 %v91
    %v503 = vunpack.c.l.b16 %v92
    %v504 = vunpack.c.h.b16 %v92
    %v505 = vunpack.c.l.b16 %v93
    %v506 = vunpack.c.l.b16 %v94
    %v507 = vunpack.c.h.b16 %v94
    %v508 = vunpack.c.l.b16 %v95
    %v509 = vunpack.c.h.b16 %v95
    %v510 = vunpack.c.l.b16 %v96
    %v511 = vunpack.c.h.b16 %v96
    %v512 = vunpack.c.l.b16 %v97
    %v513 = vunpack.c.l.b16 %v98
    %v514 = vunpack.c.h.b16 %v98
    %v515 = vunpack.c.l.b16 %v99
    %v516 = vunpack.c.h.b16 %v99
    %v517 = vunpack.c.l.b16 %v100
    %v518 = vunpack.c.h.b16 %v100
    %v519 = vunpack.c.l.b16 %v101
    %v520 = vunpack.c.l.b16 %v102
    %v521 = vunpack.c.h.b16 %v102
    %v522 = vunpack.c.l.b16 %v103
    %v523 = vunpack.c.h.b16 %v103
    %v524 = vunpack.c.l.b16 %v104
    %v525 = vunpack.c.h.b16 %v104
    %v526 = vunpack.c.l.b16 %v105
    %v527 = vunpack.c.l.b16 %v106
    %v528 = vunpack.c.h.b16 %v106
    %v529 = vunpack.c.l.b16 %v107
    %v530 = vunpack.c.h.b16 %v107
    %v531 = vunpack.c.l.b16 %v108
    %v532 = vunpack.c.h.b16 %v108
    %v533 = vunpack.c.l.b16 %v109
    %v534 = vunpack.c.l.b16 %v110
    %v535 = vunpack.c.h.b16 %v110
    %v536 = vunpack.c.l.b16 %v111
    %v537 = vunpack.c.h.b16 %v111
    %v538 = vunpack.c.l.b16 %v112
    %v539 = vunpack.c.h.b16 %v112
    %v540 = vunpack.c.l.b16 %v113
    %v541 = vunpack.c.l.b16 %v114
    %v542 = vunpack.c.h.b16 %v114
    %v543 = vunpack.c.l.b16 %v115
    %v544 = vunpack.c.h.b16 %v115
    %v545 = vunpack.c.l.b16 %v116
    %v546 = vunpack.c.h.b16 %v116
    %v547 = vunpack.c.l.b16 %v117
    %v548 = vunpack.c.l.b16 %v118
    %v549 = vunpack.c.h.b16 %v118
    %v550 = vunpack.c.l.b16 %v119
    %v551 = vunpack.c.h.b16 %v119
    %v552 = vunpack.c.l.b16 %v120
    %v553 = vunpack.c.h.b16 %v120
    %v554 = vunpack.c.l.b16 %v121
    %v555 = vunpack.c.l.b16 %v122
    %v556 = vunpack.c.h.b16 %v122
    %v557 = vunpack.c.l.b16 %v123
    %v558 = vunpack.c.h.b16 %v123
    %v559 = vunpack.c.l.b16 %v124
    %v560 = vunpack.c.h.b16 %v124
    %v561 = vunpack.c.l.b16 %v125
    %v562 = vunpack.c.l.b16 %v126
    %v563 = vunpack.c.h.b16 %v126
    %v564 = vunpack.c.l.b16 %v127
    %v565 = vunpack.c.h.b16 %v127
    %v566 = vunpack.c.l.b16 %v128
    %v567 = vunpack.c.h.b16 %v128
    %v568 = vunpack.c.l.b16 %v129
    %v569 = vunpack.c.l.b16 %v130
    %v570 = vunpack.c.h.b16 %v130
    %v571 = vunpack.c.l.b16 %v131
    %v572 = vunpack.c.h.b16 %v131
    %v573 = vunpack.c.l.b16 %v132
    %v574 = vunpack.c.h.b16 %v132
    %v575 = vunpack.c.l.b16 %v133
    %v576 = vunpack.c.l.b16 %v134
    %v577 = vunpack.c.h.b16 %v134
    %v578 = vunpack.c.l.b16 %v135
    %v579 = vunpack.c.h.b16 %v135
    %v580 = vunpack.c.l.b16 %v136
    %v581 = vunpack.c.h.b16 %v136
    %v582 = vunpack.c.l.b16 %v137
    %v583 = vunpack.c.l.b16 %v138
    %v584 = vunpack.c.h.b16 %v138
    %v585 = vunpack.c.l.b16 %v139
    %v586 = vunpack.c.h.b16 %v139
    %v587 = vunpack.c.l.b16 %v140
    %v588 = vunpack.c.h.b16 %v140
    %v589 = vunpack.c.l.b16 %v141
    %v590 = vunpack.c.l.b16 %v142
    %v591 = vunpack.c.h.b16 %v142
    %v592 = vunpack.c.l.b16 %v143
    %v593 = vunpack.c.h.b16 %v143
    %v594 = vunpack.c.l.b16 %v144
    %v595 = vunpack.c.h.b16 %v144
    %v596 = vunpack.c.l.b16 %v145
    %v597 = vunpack.c.l.b16 %v146
    %v598 = vunpack.c.h.b16 %v146
    %v599 = vunpack.c.l.b16 %v147
    %v600 = vunpack.c.h.b16 %v147
    %v601 = vunpack.c.l.b16 %v148
    %v602 = vunpack.c.h.b16 %v148
    %v603 = vunpack.c.l.b16 %v149
    %v604 = vpack.c.b16 %v387, %v380
    %v605 = vpack.c.b16 %v388, %v381
    %v606 = vpack.c.b16 %v389, %v382
    %v607 = vpack.c.b16 %v390, %v383
    %v608 = vpack.c.b16 %v391, %v384
    %v609 = vpack.c.b16 %v392, %v385
    %v610 = vpack.c.b16 %v393, %v386
    %v611 = vpack.c.b16 %v401, %v394
    %v612 = vpack.c.b16 %v402, %v395
    %v613 = vpack.c.b16 %v403, %v396
    %v614 = vpack.c.b16 %v404, %v397
    %v615 = vpack.c.b16 %v405, %v398
    %v616 = vpack.c.b16 %v406, %v399
    %v617 = vpack.c.b16 %v407, %v400
    %v618 = vpack.c.b16 %v415, %v408
    %v619 = vpack.c.b16 %v416, %v409
    %v620 = vpack.c.b16 %v417, %v410
    %v621 = vpack.c.b16 %v418, %v411
    %v622 = vpack.c.b16 %v419, %v412
    %v623 = vpack.c.b16 %v420, %v413
    %v624 = vpack.c.b16 %v421, %v414
    %v625 = vpack.c.b16 %v429, %v422
    %v626 = vpack.c.b16 %v430, %v423
    %v627 = vpack.c.b16 %v431, %v424
    %v628 = vpack.c.b16 %v432, %v425
    %v629 = vpack.c.b16 %v433, %v426
    %v630 = vpack.c.b16 %v434, %v427
    %v631 = vpack.c.b16 %v435, %v428
    %v632 = vpack.c.b16 %v443, %v436
    %v633 = vpack.c.b16 %v444, %v437
    %v634 = vpack.c.b16 %v445, %v438
    %v635 = vpack.c.b16 %v446, %v439
    %v636 = vpack.c.b16 %v447, %v440
    %v637 = vpack.c.b16 %v448, %v441
    %v638 = vpack.c.b16 %v449, %v442
    %v639 = vpack.c.b16 %v457, %v450
    %v640 = vpack.c.b16 %v458, %v451
    %v641 = vpack.c.b16 %v459, %v452
    %v642 = vpack.c.b16 %v460, %v453
    %v643 = vpack.c.b16 %v461, %v454
    %v644 = vpack.c.b16 %v462, %v455
    %v645 = vpack.c.b16 %v463, %v456
    %v646 = vpack.c.b16 %v471, %v464
    %v647 = vpack.c.b16 %v472, %v465
    %v648 = vpack.c.b16 %v473, %v466
    %v649 = vpack.c.b16 %v474, %v467
    %v650 = vpack.c.b16 %v475, %v468
    %v651 = vpack.c.b16 %v476, %v469
    %v652 = vpack.c.b16 %v477, %v470
    %v653 = vpack.c.b16 %v485, %v478
    %v654 = vpack.c.b16 %v486, %v479
    %v655 = vpack.c.b16 %v487, %v480
    %v656 = vpack.c.b16 %v488, %v481
    %v657 = vpack.c.b16 %v489, %v482
    %v658 = vpack.c.b16 %v490, %v483
    %v659 = vpack.c.b16 %v491, %v484
    %v660 = vpack.c.b16 %v499, %v492
    %v661 = vpack.c.b16 %v500, %v493
    %v662 = vpack.c.b16 %v501, %v494
    %v663 = vpack.c.b16 %v502, %v495
    %v664 = vpack.c.b16 %v503, %v496
    %v665 = vpack.c.b16 %v504, %v497
    %v666 = vpack.c.b16 %v505, %v498
    %v667 = vpack.c.b16 %v513, %v506
    %v668 = vpack.c.b16 %v514, %v507
    %v669 = vpack.c.b16 %v515, %v508
    %v670 = vpack.c.b16 %v516, %v509
    %v671 = vpack.c.b16 %v517, %v510
    %v672 = vpack.c.b16 %v518, %v511
    %v673 = vpack.c.b16 %v519, %v512
    %v674 = vpack.c.b16 %v527, %v520
    %v675 = vpack.c.b16 %v528, %v521
    %v676 = vpack.c.b16 %v529, %v522
    %v677 = vpack.c.b16 %v530, %v523
    %v678 = vpack.c.b16 %v531, %v524
    %v679 = vpack.c.b16 %v532, %v525
    %v680 = vpack.c.b16 %v533, %v526
    %v681 = vpack.c.b16 %v541, %v534
    %v682 = vpack.c.b16 %v542, %v535
    %v683 = vpack.c.b16 %v543, %v536
    %v684 = vpack.c.b16 %v544, %v537
    %v685 = vpack.c.b16 %v545, %v538
    %v686 = vpack.c.b16 %v546, %v539
    %v687 = vpack.c.b16 %v547, %v540
    %v688 = vpack.c.b16 %v555, %v548
    %v689 = vpack.c.b16 %v556, %v549
    %v690 = vpack.c.b16 %v557, %v550
    %v691 = vpack.c.b16 %v558, %v551
    %v692 = vpack.c.b16 %v559, %v552
    %v693 = vpack.c.b16 %v560, %v553
    %v694 = vpack.c.b16 %v561, %v554
    %v695 = vpack.c.b16 %v569, %v562
    %v696 = vpack.c.b16 %v570, %v563
    %v697 = vpack.c.b16 %v571, %v564
    %v698 = vpack.c.b16 %v572, %v565
    %v699 = vpack.c.b16 %v573, %v566
    %v700 = vpack.c.b16 %v574, %v567
    %v701 = vpack.c.b16 %v575, %v568
    %v702 = vpack.c.b16 %v583, %v576
    %v703 = vpack.c.b16 %v584, %v577
    %v704 = vpack.c.b16 %v585, %v578
    %v705 = vpack.c.b16 %v586, %v579
    %v706 = vpack.c.b16 %v587, %v580
    %v707 = vpack.c.b16 %v588, %v581
    %v708 = vpack.c.b16 %v589, %v582
    %v709 = vpack.c.b16 %v597, %v590
    %v710 = vpack.c.b16 %v598, %v591
    %v711 = vpack.c.b16 %v599, %v592
    %v712 = vpack.c.b16 %v600, %v593
    %v713 = vpack.c.b16 %v601, %v594
    %v714 = vpack.c.b16 %v602, %v595
    %v715 = vpack.c.b16 %v603, %v596
    %v910 = vunpack.c.l.b16 %v150
    %v911 = vunpack.c.l.b16 %v151
    %v912 = vunpack.c.l.b16 %v152
    %v913 = vunpack.c.l.b16 %v153
    %v914 = vunpack.c.l.b16 %v154
    %v915 = vunpack.c.l.b16 %v155
    %v916 = vunpack.c.l.b16 %v156
    %v917 = vunpack.c.l.b16 %v157
    %v918 = vunpack.c.l.b16 %v158
    %v919 = vunpack.c.l.b16 %v159
    %v920 = vunpack.c.l.b16 %v160
    %v921 = vunpack.c.l.b16 %v161
    %v922 = vunpack.c.l.b16 %v162
    %v923 = vunpack.c.l.b16 %v163
    %v924 = vunpack.c.l.b16 %v164
    %v925 = vunpack.c.l.b16 %v165
    %v926 = vunpack.c.l.b16 %v166
    %v927 = vunpack.c.l.b16 %v167
    %v928 = vunpack.c.l.b16 %v168
    %v929 = vunpack.c.l.b16 %v169
    %v930 = vunpack.c.l.b16 %v170
    %v931 = vunpack.c.l.b16 %v171
    %v932 = vunpack.c.l.b16 %v172
    %v933 = vunpack.c.l.b16 %v173
    %v934 = vunpack.c.l.b16 %v174
    %v935 = vunpack.c.l.b16 %v175
    %v936 = vunpack.c.l.b16 %v176
    %v937 = vunpack.c.l.b16 %v177
    %v938 = vunpack.c.l.b16 %v178
    %v939 = vunpack.c.l.b16 %v179
    %v940 = vunpack.c.l.b16 %v180
    %v941 = vunpack.c.l.b16 %v181
    %v942 = vunpack.c.l.b16 %v182
    %v943 = vunpack.c.l.b16 %v183
    %v944 = vunpack.c.l.b16 %v184
    %v945 = vunpack.c.l.b16 %v185
    %v946 = vunpack.c.l.b16 %v186
    %v947 = vunpack.c.l.b16 %v187
    %v948 = vunpack.c.l.b16 %v188
    %v949 = vunpack.c.l.b16 %v189
    %v950 = vunpack.c.l.b16 %v190
    %v951 = vunpack.c.l.b16 %v191
    %v952 = vunpack.c.l.b16 %v192
    %v953 = vunpack.c.l.b16 %v193
    %v954 = vunpack.c.l.b16 %v194
    %v955 = vunpack.c.l.b16 %v195
    %v956 = vunpack.c.l.b16 %v196
    %v957 = vunpack.c.l.b16 %v197
    %v958 = vunpack.c.l.b16 %v198
    %v959 = vunpack.c.l.b16 %v199
    %v960 = vunpack.c.l.b16 %v200
    %v961 = vunpack.c.l.b16 %v201
    %v962 = vunpack.c.l.b16 %v202
    %v963 = vunpack.c.l.b16 %v203
    %v964 = vunpack.c.l.b16 %v204
    %v965 = vunpack.c.l.b16 %v205
    %v966 = vunpack.c.l.b16 %v206
    %v967 = vunpack.c.l.b16 %v207
    %v968 = vunpack.c.l.b16 %v208
    %v969 = vunpack.c.l.b16 %v209
    %v970 = vunpack.c.l.b16 %v210
    %v971 = vunpack.c.l.b16 %v211
    %v972 = vunpack.c.l.b16 %v212
    %v973 = vunpack.c.l.b16 %v213
    %v974 = vunpack.c.l.b16 %v214
    %v975 = vunpack.c.l.b16 %v215
    %v976 = vunpack.c.l.b16 %v216
    %v977 = vunpack.c.l.b16 %v217
    %v978 = vunpack.c.l.b16 %v218
    %v979 = vunpack.c.l.b16 %v219
    %v980 = vunpack.c.l.b16 %v220
    %v981 = vunpack.c.l.b16 %v221
    %v982 = vunpack.c.l.b16 %v222
    %v983 = vunpack.c.l.b16 %v223
    %v984 = vunpack.c.l.b16 %v224
    %v985 = vunpack.c.l.b16 %v225
    %v986 = vunpack.c.l.b16 %v226
    %v987 = vunpack.c.l.b16 %v227
    %v988 = vunpack.c.l.b16 %v228
    %v989 = vunpack.c.l.b16 %v229
    %v990 = vunpack.c.l.b16 %v230
    %v991 = vunpack.c.l.b16 %v231
    %v992 = vunpack.c.l.b16 %v232
    %v993 = vunpack.c.l.b16 %v233
    %v994 = vunpack.c.l.b16 %v234
    %v995 = vunpack.c.l.b16 %v235
    %v996 = vunpack.c.l.b16 %v236
    %v997 = vunpack.c.l.b16 %v237
    %v998 = vunpack.c.l.b16 %v238
    %v999 = vunpack.c.l.b16 %v239
    %v1000 = vunpack.c.l.b16 %v240
    %v1001 = vunpack.c.l.b16 %v241
    %v1002 = vunpack.c.l.b16 %v242
    %v1003 = vunpack.c.l.b16 %v243
    %v1004 = vunpack.c.l.b16 %v244
    %v1005 = vunpack.c.l.b16 %v245
    %v1006 = vunpack.c.l.b16 %v246
    %v1007 = vunpack.c.l.b16 %v247
    %v1008 = vpack.c.b16 %v911, %v910
    %v1009 = vpack.c.b16 %v913, %v912
    %v1010 = vpack.c.b16 %v915, %v914
    %v1011 = vpack.c.b16 %v917, %v916
    %v1012 = vpack.c.b16 %v919, %v918
    %v1013 = vpack.c.b16 %v921, %v920
    %v1014 = vpack.c.b16 %v923, %v922
    %v1015 = vpack.c.b16 %v925, %v924
    %v1016 = vpack.c.b16 %v927, %v926
    %v1017 = vpack.c.b16 %v929, %v928
    %v1018 = vpack.c.b16 %v931, %v930
    %v1019 = vpack.c.b16 %v933, %v932
    %v1020 = vpack.c.b16 %v935, %v934
    %v1021 = vpack.c.b16 %v937, %v936
    %v1022 = vpack.c.b16 %v939, %v938
    %v1023 = vpack.c.b16 %v941, %v940
    %v1024 = vpack.c.b16 %v943, %v942
    %v1025 = vpack.c.b16 %v945, %v944
    %v1026 = vpack.c.b16 %v947, %v946
    %v1027 = vpack.c.b16 %v949, %v948
    %v1028 = vpack.c.b16 %v951, %v950
    %v1029 = vpack.c.b16 %v953, %v952
    %v1030 = vpack.c.b16 %v955, %v954
    %v1031 = vpack.c.b16 %v957, %v956
    %v1032 = vpack.c.b16 %v959, %v958
    %v1033 = vpack.c.b16 %v961, %v960
    %v1034 = vpack.c.b16 %v963, %v962
    %v1035 = vpack.c.b16 %v965, %v964
    %v1036 = vpack.c.b16 %v967, %v966
    %v1037 = vpack.c.b16 %v969, %v968
    %v1038 = vpack.c.b16 %v971, %v970
    %v1039 = vpack.c.b16 %v973, %v972
    %v1040 = vpack.c.b16 %v975, %v974
    %v1041 = vpack.c.b16 %v977, %v976
    %v1042 = vpack.c.b16 %v979, %v978
    %v1043 = vpack.c.b16 %v981, %v980
    %v1044 = vpack.c.b16 %v983, %v982
    %v1045 = vpack.c.b16 %v985, %v984
    %v1046 = vpack.c.b16 %v987, %v986
    %v1047 = vpack.c.b16 %v989, %v988
    %v1048 = vpack.c.b16 %v991, %v990
    %v1049 = vpack.c.b16 %v993, %v992
    %v1050 = vpack.c.b16 %v995, %v994
    %v1051 = vpack.c.b16 %v997, %v996
    %v1052 = vpack.c.b16 %v999, %v998
    %v1053 = vpack.c.b16 %v1001, %v1000
    %v1054 = vpack.c.b16 %v1003, %v1002
    %v1055 = vpack.c.b16 %v1005, %v1004
    %v1056 = vpack.c.b16 %v1007, %v1006
    %vm1106 = vcmask 130048
    %v1108 = vsel %vm1106, %v610, 0
    %v1111 = vsel %vm1106, %v617, 0
    %v1114 = vsel %vm1106, %v624, 0
    %v1117 = vsel %vm1106, %v631, 0
    %v1120 = vsel %vm1106, %v638, 0
    %v1123 = vsel %vm1106, %v645, 0
    %v1126 = vsel %vm1106, %v652, 0
    %v1129 = vsel %vm1106, %v659, 0
    %v1132 = vsel %vm1106, %v666, 0
    %v1135 = vsel %vm1106, %v673, 0
    %v1138 = vsel %vm1106, %v680, 0
    %v1141 = vsel %vm1106, %v687, 0
    %v1144 = vsel %vm1106, %v694, 0
    %v1147 = vsel %vm1106, %v701, 0
    %v1150 = vsel %vm1106, %v708, 0
    %v1153 = vsel %vm1106, %v715, 0
    %1155 = vmatpush.bf16.msra.mxu0 %v1015
    %1156 = vmatpush.bf16.msra.mxu0 %v1014
    %1157 = vmatpush.bf16.msra.mxu0 %v1013
    %1158 = vmatpush.bf16.msra.mxu0 %v1012
    %1159 = vmatpush.bf16.msra.mxu0 %v1011
    %1160 = vmatpush.bf16.msra.mxu0 %v1010
    %1161 = vmatpush.bf16.msra.mxu0 %v1009
    %1162 = vmatpush.bf16.msra.mxu0 %v1008
    %1163 = vmatmul.bf16.gmra.mxu0 %v604
    %v1164 = vpop.f32.mrf.mxu0
    %v1165 = vadd.f32 %v250, %v1164
    %v1166 = vpop.f32.mrf.mxu0
    %v1167 = vadd.f32 %v250, %v1166
    %1168 = vmatmul.bf16.gmra.mxu0 %v611
    %v1169 = vpop.f32.mrf.mxu0
    %v1170 = vadd.f32 %v250, %v1169
    %v1171 = vpop.f32.mrf.mxu0
    %v1172 = vadd.f32 %v250, %v1171
    %1173 = vmatmul.bf16.gmra.mxu0 %v618
    %v1174 = vpop.f32.mrf.mxu0
    %v1175 = vadd.f32 %v250, %v1174
    %v1176 = vpop.f32.mrf.mxu0
    %v1177 = vadd.f32 %v250, %v1176
    %1178 = vmatmul.bf16.gmra.mxu0 %v625
    %v1179 = vpop.f32.mrf.mxu0
    %v1180 = vadd.f32 %v250, %v1179
    %v1181 = vpop.f32.mrf.mxu0
    %v1182 = vadd.f32 %v250, %v1181
    %1183 = vmatmul.bf16.gmra.mxu0 %v632
    %v1184 = vpop.f32.mrf.mxu0
    %v1185 = vadd.f32 %v250, %v1184
    %v1186 = vpop.f32.mrf.mxu0
    %v1187 = vadd.f32 %v250, %v1186
    %1188 = vmatmul.bf16.gmra.mxu0 %v639
    %v1189 = vpop.f32.mrf.mxu0
    %v1190 = vadd.f32 %v250, %v1189
    %v1191 = vpop.f32.mrf.mxu0
    %v1192 = vadd.f32 %v250, %v1191
    %1193 = vmatmul.bf16.gmra.mxu0 %v646
    %v1194 = vpop.f32.mrf.mxu0
    %v1195 = vadd.f32 %v250, %v1194
    %v1196 = vpop.f32.mrf.mxu0
    %v1197 = vadd.f32 %v250, %v1196
    %1198 = vmatmul.bf16.gmra.mxu0 %v653
    %v1199 = vpop.f32.mrf.mxu0
    %v1200 = vadd.f32 %v250, %v1199
    %v1201 = vpop.f32.mrf.mxu0
    %v1202 = vadd.f32 %v250, %v1201
    %1203 = vmatmul.bf16.gmra.mxu0 %v660
    %v1204 = vpop.f32.mrf.mxu0
    %v1205 = vadd.f32 %v250, %v1204
    %v1206 = vpop.f32.mrf.mxu0
    %v1207 = vadd.f32 %v250, %v1206
    %1208 = vmatmul.bf16.gmra.mxu0 %v667
    %v1209 = vpop.f32.mrf.mxu0
    %v1210 = vadd.f32 %v250, %v1209
    %v1211 = vpop.f32.mrf.mxu0
    %v1212 = vadd.f32 %v250, %v1211
    %1213 = vmatmul.bf16.gmra.mxu0 %v674
    %v1214 = vpop.f32.mrf.mxu0
    %v1215 = vadd.f32 %v250, %v1214
    %v1216 = vpop.f32.mrf.mxu0
    %v1217 = vadd.f32 %v250, %v1216
    %1218 = vmatmul.bf16.gmra.mxu0 %v681
    %v1219 = vpop.f32.mrf.mxu0
    %v1220 = vadd.f32 %v250, %v1219
    %v1221 = vpop.f32.mrf.mxu0
    %v1222 = vadd.f32 %v250, %v1221
    %1223 = vmatmul.bf16.gmra.mxu0 %v688
    %v1224 = vpop.f32.mrf.mxu0
    %v1225 = vadd.f32 %v250, %v1224
    %v1226 = vpop.f32.mrf.mxu0
    %v1227 = vadd.f32 %v250, %v1226
    %1228 = vmatmul.bf16.gmra.mxu0 %v695
    %v1229 = vpop.f32.mrf.mxu0
    %v1230 = vadd.f32 %v250, %v1229
    %v1231 = vpop.f32.mrf.mxu0
    %v1232 = vadd.f32 %v250, %v1231
    %1233 = vmatmul.bf16.gmra.mxu0 %v702
    %v1234 = vpop.f32.mrf.mxu0
    %v1235 = vadd.f32 %v250, %v1234
    %v1236 = vpop.f32.mrf.mxu0
    %v1237 = vadd.f32 %v250, %v1236
    %1238 = vmatmul.bf16.gmra.mxu0 %v709
    %v1239 = vpop.f32.mrf.mxu0
    %v1240 = vadd.f32 %v250, %v1239
    %v1241 = vpop.f32.mrf.mxu0
    %v1242 = vadd.f32 %v250, %v1241
    %1243 = vdwg.mxu0
    %1244 = vmatpush.bf16.msra.mxu0 %v1023
    %1245 = vmatpush.bf16.msra.mxu0 %v1022
    %1246 = vmatpush.bf16.msra.mxu0 %v1021
    %1247 = vmatpush.bf16.msra.mxu0 %v1020
    %1248 = vmatpush.bf16.msra.mxu0 %v1019
    %1249 = vmatpush.bf16.msra.mxu0 %v1018
    %1250 = vmatpush.bf16.msra.mxu0 %v1017
    %1251 = vmatpush.bf16.msra.mxu0 %v1016
    %1252 = vmatmul.bf16.gmra.mxu0 %v605
    %v1253 = vpop.f32.mrf.mxu0
    %v1254 = vadd.f32 %v1165, %v1253
    %v1255 = vpop.f32.mrf.mxu0
    %v1256 = vadd.f32 %v1167, %v1255
    %1257 = vmatmul.bf16.gmra.mxu0 %v612
    %v1258 = vpop.f32.mrf.mxu0
    %v1259 = vadd.f32 %v1170, %v1258
    %v1260 = vpop.f32.mrf.mxu0
    %v1261 = vadd.f32 %v1172, %v1260
    %1262 = vmatmul.bf16.gmra.mxu0 %v619
    %v1263 = vpop.f32.mrf.mxu0
    %v1264 = vadd.f32 %v1175, %v1263
    %v1265 = vpop.f32.mrf.mxu0
    %v1266 = vadd.f32 %v1177, %v1265
    %1267 = vmatmul.bf16.gmra.mxu0 %v626
    %v1268 = vpop.f32.mrf.mxu0
    %v1269 = vadd.f32 %v1180, %v1268
    %v1270 = vpop.f32.mrf.mxu0
    %v1271 = vadd.f32 %v1182, %v1270
    %1272 = vmatmul.bf16.gmra.mxu0 %v633
    %v1273 = vpop.f32.mrf.mxu0
    %v1274 = vadd.f32 %v1185, %v1273
    %v1275 = vpop.f32.mrf.mxu0
    %v1276 = vadd.f32 %v1187, %v1275
    %1277 = vmatmul.bf16.gmra.mxu0 %v640
    %v1278 = vpop.f32.mrf.mxu0
    %v1279 = vadd.f32 %v1190, %v1278
    %v1280 = vpop.f32.mrf.mxu0
    %v1281 = vadd.f32 %v1192, %v1280
    %1282 = vmatmul.bf16.gmra.mxu0 %v647
    %v1283 = vpop.f32.mrf.mxu0
    %v1284 = vadd.f32 %v1195, %v1283
    %v1285 = vpop.f32.mrf.mxu0
    %v1286 = vadd.f32 %v1197, %v1285
    %1287 = vmatmul.bf16.gmra.mxu0 %v654
    %v1288 = vpop.f32.mrf.mxu0
    %v1289 = vadd.f32 %v1200, %v1288
    %v1290 = vpop.f32.mrf.mxu0
    %v1291 = vadd.f32 %v1202, %v1290
    %1292 = vmatmul.bf16.gmra.mxu0 %v661
    %v1293 = vpop.f32.mrf.mxu0
    %v1294 = vadd.f32 %v1205, %v1293
    %v1295 = vpop.f32.mrf.mxu0
    %v1296 = vadd.f32 %v1207, %v1295
    %1297 = vmatmul.bf16.gmra.mxu0 %v668
    %v1298 = vpop.f32.mrf.mxu0
    %v1299 = vadd.f32 %v1210, %v1298
    %v1300 = vpop.f32.mrf.mxu0
    %v1301 = vadd.f32 %v1212, %v1300
    %1302 = vmatmul.bf16.gmra.mxu0 %v675
    %v1303 = vpop.f32.mrf.mxu0
    %v1304 = vadd.f32 %v1215, %v1303
    %v1305 = vpop.f32.mrf.mxu0
    %v1306 = vadd.f32 %v1217, %v1305
    %1307 = vmatmul.bf16.gmra.mxu0 %v682
    %v1308 = vpop.f32.mrf.mxu0
    %v1309 = vadd.f32 %v1220, %v1308
    %v1310 = vpop.f32.mrf.mxu0
    %v1311 = vadd.f32 %v1222, %v1310
    %1312 = vmatmul.bf16.gmra.mxu0 %v689
    %v1313 = vpop.f32.mrf.mxu0
    %v1314 = vadd.f32 %v1225, %v1313
    %v1315 = vpop.f32.mrf.mxu0
    %v1316 = vadd.f32 %v1227, %v1315
    %1317 = vmatmul.bf16.gmra.mxu0 %v696
    %v1318 = vpop.f32.mrf.mxu0
    %v1319 = vadd.f32 %v1230, %v1318
    %v1320 = vpop.f32.mrf.mxu0
    %v1321 = vadd.f32 %v1232, %v1320
    %1322 = vmatmul.bf16.gmra.mxu0 %v703
    %v1323 = vpop.f32.mrf.mxu0
    %v1324 = vadd.f32 %v1235, %v1323
    %v1325 = vpop.f32.mrf.mxu0
    %v1326 = vadd.f32 %v1237, %v1325
    %1327 = vmatmul.bf16.gmra.mxu0 %v710
    %v1328 = vpop.f32.mrf.mxu0
    %v1329 = vadd.f32 %v1240, %v1328
    %v1330 = vpop.f32.mrf.mxu0
    %v1331 = vadd.f32 %v1242, %v1330
    %1332 = vdwg.mxu0
    %1333 = vmatpush.bf16.msra.mxu0 %v1031
    %1334 = vmatpush.bf16.msra.mxu0 %v1030
    %1335 = vmatpush.bf16.msra.mxu0 %v1029
    %1336 = vmatpush.bf16.msra.mxu0 %v1028
    %1337 = vmatpush.bf16.msra.mxu0 %v1027
    %1338 = vmatpush.bf16.msra.mxu0 %v1026
    %1339 = vmatpush.bf16.msra.mxu0 %v1025
    %1340 = vmatpush.bf16.msra.mxu0 %v1024
    %1341 = vmatmul.bf16.gmra.mxu0 %v606
    %v1342 = vpop.f32.mrf.mxu0
    %v1343 = vadd.f32 %v1254, %v1342
    %v1344 = vpop.f32.mrf.mxu0
    %v1345 = vadd.f32 %v1256, %v1344
    %1346 = vmatmul.bf16.gmra.mxu0 %v613
    %v1347 = vpop.f32.mrf.mxu0
    %v1348 = vadd.f32 %v1259, %v1347
    %v1349 = vpop.f32.mrf.mxu0
    %v1350 = vadd.f32 %v1261, %v1349
    %1351 = vmatmul.bf16.gmra.mxu0 %v620
    %v1352 = vpop.f32.mrf.mxu0
    %v1353 = vadd.f32 %v1264, %v1352
    %v1354 = vpop.f32.mrf.mxu0
    %v1355 = vadd.f32 %v1266, %v1354
    %1356 = vmatmul.bf16.gmra.mxu0 %v627
    %v1357 = vpop.f32.mrf.mxu0
    %v1358 = vadd.f32 %v1269, %v1357
    %v1359 = vpop.f32.mrf.mxu0
    %v1360 = vadd.f32 %v1271, %v1359
    %1361 = vmatmul.bf16.gmra.mxu0 %v634
    %v1362 = vpop.f32.mrf.mxu0
    %v1363 = vadd.f32 %v1274, %v1362
    %v1364 = vpop.f32.mrf.mxu0
    %v1365 = vadd.f32 %v1276, %v1364
    %1366 = vmatmul.bf16.gmra.mxu0 %v641
    %v1367 = vpop.f32.mrf.mxu0
    %v1368 = vadd.f32 %v1279, %v1367
    %v1369 = vpop.f32.mrf.mxu0
    %v1370 = vadd.f32 %v1281, %v1369
    %1371 = vmatmul.bf16.gmra.mxu0 %v648
    %v1372 = vpop.f32.mrf.mxu0
    %v1373 = vadd.f32 %v1284, %v1372
    %v1374 = vpop.f32.mrf.mxu0
    %v1375 = vadd.f32 %v1286, %v1374
    %1376 = vmatmul.bf16.gmra.mxu0 %v655
    %v1377 = vpop.f32.mrf.mxu0
    %v1378 = vadd.f32 %v1289, %v1377
    %v1379 = vpop.f32.mrf.mxu0
    %v1380 = vadd.f32 %v1291, %v1379
    %1381 = vmatmul.bf16.gmra.mxu0 %v662
    %v1382 = vpop.f32.mrf.mxu0
    %v1383 = vadd.f32 %v1294, %v1382
    %v1384 = vpop.f32.mrf.mxu0
    %v1385 = vadd.f32 %v1296, %v1384
    %1386 = vmatmul.bf16.gmra.mxu0 %v669
    %v1387 = vpop.f32.mrf.mxu0
    %v1388 = vadd.f32 %v1299, %v1387
    %v1389 = vpop.f32.mrf.mxu0
    %v1390 = vadd.f32 %v1301, %v1389
    %1391 = vmatmul.bf16.gmra.mxu0 %v676
    %v1392 = vpop.f32.mrf.mxu0
    %v1393 = vadd.f32 %v1304, %v1392
    %v1394 = vpop.f32.mrf.mxu0
    %v1395 = vadd.f32 %v1306, %v1394
    %1396 = vmatmul.bf16.gmra.mxu0 %v683
    %v1397 = vpop.f32.mrf.mxu0
    %v1398 = vadd.f32 %v1309, %v1397
    %v1399 = vpop.f32.mrf.mxu0
    %v1400 = vadd.f32 %v1311, %v1399
    %1401 = vmatmul.bf16.gmra.mxu0 %v690
    %v1402 = vpop.f32.mrf.mxu0
    %v1403 = vadd.f32 %v1314, %v1402
    %v1404 = vpop.f32.mrf.mxu0
    %v1405 = vadd.f32 %v1316, %v1404
    %1406 = vmatmul.bf16.gmra.mxu0 %v697
    %v1407 = vpop.f32.mrf.mxu0
    %v1408 = vadd.f32 %v1319, %v1407
    %v1409 = vpop.f32.mrf.mxu0
    %v1410 = vadd.f32 %v1321, %v1409
    %1411 = vmatmul.bf16.gmra.mxu0 %v704
    %v1412 = vpop.f32.mrf.mxu0
    %v1413 = vadd.f32 %v1324, %v1412
    %v1414 = vpop.f32.mrf.mxu0
    %v1415 = vadd.f32 %v1326, %v1414
    %1416 = vmatmul.bf16.gmra.mxu0 %v711
    %v1417 = vpop.f32.mrf.mxu0
    %v1418 = vadd.f32 %v1329, %v1417
    %v1419 = vpop.f32.mrf.mxu0
    %v1420 = vadd.f32 %v1331, %v1419
    %1421 = vdwg.mxu0
    %1422 = vmatpush.bf16.msra.mxu0 %v1039
    %1423 = vmatpush.bf16.msra.mxu0 %v1038
    %1424 = vmatpush.bf16.msra.mxu0 %v1037
    %1425 = vmatpush.bf16.msra.mxu0 %v1036
    %1426 = vmatpush.bf16.msra.mxu0 %v1035
    %1427 = vmatpush.bf16.msra.mxu0 %v1034
    %1428 = vmatpush.bf16.msra.mxu0 %v1033
    %1429 = vmatpush.bf16.msra.mxu0 %v1032
    %1430 = vmatmul.bf16.gmra.mxu0 %v607
    %v1431 = vpop.f32.mrf.mxu0
    %v1432 = vadd.f32 %v1343, %v1431
    %v1433 = vpop.f32.mrf.mxu0
    %v1434 = vadd.f32 %v1345, %v1433
    %1435 = vmatmul.bf16.gmra.mxu0 %v614
    %v1436 = vpop.f32.mrf.mxu0
    %v1437 = vadd.f32 %v1348, %v1436
    %v1438 = vpop.f32.mrf.mxu0
    %v1439 = vadd.f32 %v1350, %v1438
    %1440 = vmatmul.bf16.gmra.mxu0 %v621
    %v1441 = vpop.f32.mrf.mxu0
    %v1442 = vadd.f32 %v1353, %v1441
    %v1443 = vpop.f32.mrf.mxu0
    %v1444 = vadd.f32 %v1355, %v1443
    %1445 = vmatmul.bf16.gmra.mxu0 %v628
    %v1446 = vpop.f32.mrf.mxu0
    %v1447 = vadd.f32 %v1358, %v1446
    %v1448 = vpop.f32.mrf.mxu0
    %v1449 = vadd.f32 %v1360, %v1448
    %1450 = vmatmul.bf16.gmra.mxu0 %v635
    %v1451 = vpop.f32.mrf.mxu0
    %v1452 = vadd.f32 %v1363, %v1451
    %v1453 = vpop.f32.mrf.mxu0
    %v1454 = vadd.f32 %v1365, %v1453
    %1455 = vmatmul.bf16.gmra.mxu0 %v642
    %v1456 = vpop.f32.mrf.mxu0
    %v1457 = vadd.f32 %v1368, %v1456
    %v1458 = vpop.f32.mrf.mxu0
    %v1459 = vadd.f32 %v1370, %v1458
    %1460 = vmatmul.bf16.gmra.mxu0 %v649
    %v1461 = vpop.f32.mrf.mxu0
    %v1462 = vadd.f32 %v1373, %v1461
    %v1463 = vpop.f32.mrf.mxu0
    %v1464 = vadd.f32 %v1375, %v1463
    %1465 = vmatmul.bf16.gmra.mxu0 %v656
    %v1466 = vpop.f32.mrf.mxu0
    %v1467 = vadd.f32 %v1378, %v1466
    %v1468 = vpop.f32.mrf.mxu0
    %v1469 = vadd.f32 %v1380, %v1468
    %1470 = vmatmul.bf16.gmra.mxu0 %v663
    %v1471 = vpop.f32.mrf.mxu0
    %v1472 = vadd.f32 %v1383, %v1471
    %v1473 = vpop.f32.mrf.mxu0
    %v1474 = vadd.f32 %v1385, %v1473
    %1475 = vmatmul.bf16.gmra.mxu0 %v670
    %v1476 = vpop.f32.mrf.mxu0
    %v1477 = vadd.f32 %v1388, %v1476
    %v1478 = vpop.f32.mrf.mxu0
    %v1479 = vadd.f32 %v1390, %v1478
    %1480 = vmatmul.bf16.gmra.mxu0 %v677
    %v1481 = vpop.f32.mrf.mxu0
    %v1482 = vadd.f32 %v1393, %v1481
    %v1483 = vpop.f32.mrf.mxu0
    %v1484 = vadd.f32 %v1395, %v1483
    %1485 = vmatmul.bf16.gmra.mxu0 %v684
    %v1486 = vpop.f32.mrf.mxu0
    %v1487 = vadd.f32 %v1398, %v1486
    %v1488 = vpop.f32.mrf.mxu0
    %v1489 = vadd.f32 %v1400, %v1488
    %1490 = vmatmul.bf16.gmra.mxu0 %v691
    %v1491 = vpop.f32.mrf.mxu0
    %v1492 = vadd.f32 %v1403, %v1491
    %v1493 = vpop.f32.mrf.mxu0
    %v1494 = vadd.f32 %v1405, %v1493
    %1495 = vmatmul.bf16.gmra.mxu0 %v698
    %v1496 = vpop.f32.mrf.mxu0
    %v1497 = vadd.f32 %v1408, %v1496
    %v1498 = vpop.f32.mrf.mxu0
    %v1499 = vadd.f32 %v1410, %v1498
    %1500 = vmatmul.bf16.gmra.mxu0 %v705
    %v1501 = vpop.f32.mrf.mxu0
    %v1502 = vadd.f32 %v1413, %v1501
    %v1503 = vpop.f32.mrf.mxu0
    %v1504 = vadd.f32 %v1415, %v1503
    %1505 = vmatmul.bf16.gmra.mxu0 %v712
    %v1506 = vpop.f32.mrf.mxu0
    %v1507 = vadd.f32 %v1418, %v1506
    %v1508 = vpop.f32.mrf.mxu0
    %v1509 = vadd.f32 %v1420, %v1508
    %1510 = vdwg.mxu0
    %1511 = vmatpush.bf16.msra.mxu0 %v1047
    %1512 = vmatpush.bf16.msra.mxu0 %v1046
    %1513 = vmatpush.bf16.msra.mxu0 %v1045
    %1514 = vmatpush.bf16.msra.mxu0 %v1044
    %1515 = vmatpush.bf16.msra.mxu0 %v1043
    %1516 = vmatpush.bf16.msra.mxu0 %v1042
    %1517 = vmatpush.bf16.msra.mxu0 %v1041
    %1518 = vmatpush.bf16.msra.mxu0 %v1040
    %1519 = vmatmul.bf16.gmra.mxu0 %v608
    %v1520 = vpop.f32.mrf.mxu0
    %v1521 = vadd.f32 %v1432, %v1520
    %v1522 = vpop.f32.mrf.mxu0
    %v1523 = vadd.f32 %v1434, %v1522
    %1524 = vmatmul.bf16.gmra.mxu0 %v615
    %v1525 = vpop.f32.mrf.mxu0
    %v1526 = vadd.f32 %v1437, %v1525
    %v1527 = vpop.f32.mrf.mxu0
    %v1528 = vadd.f32 %v1439, %v1527
    %1529 = vmatmul.bf16.gmra.mxu0 %v622
    %v1530 = vpop.f32.mrf.mxu0
    %v1531 = vadd.f32 %v1442, %v1530
    %v1532 = vpop.f32.mrf.mxu0
    %v1533 = vadd.f32 %v1444, %v1532
    %1534 = vmatmul.bf16.gmra.mxu0 %v629
    %v1535 = vpop.f32.mrf.mxu0
    %v1536 = vadd.f32 %v1447, %v1535
    %v1537 = vpop.f32.mrf.mxu0
    %v1538 = vadd.f32 %v1449, %v1537
    %1539 = vmatmul.bf16.gmra.mxu0 %v636
    %v1540 = vpop.f32.mrf.mxu0
    %v1541 = vadd.f32 %v1452, %v1540
    %v1542 = vpop.f32.mrf.mxu0
    %v1543 = vadd.f32 %v1454, %v1542
    %1544 = vmatmul.bf16.gmra.mxu0 %v643
    %v1545 = vpop.f32.mrf.mxu0
    %v1546 = vadd.f32 %v1457, %v1545
    %v1547 = vpop.f32.mrf.mxu0
    %v1548 = vadd.f32 %v1459, %v1547
    %1549 = vmatmul.bf16.gmra.mxu0 %v650
    %v1550 = vpop.f32.mrf.mxu0
    %v1551 = vadd.f32 %v1462, %v1550
    %v1552 = vpop.f32.mrf.mxu0
    %v1553 = vadd.f32 %v1464, %v1552
    %1554 = vmatmul.bf16.gmra.mxu0 %v657
    %v1555 = vpop.f32.mrf.mxu0
    %v1556 = vadd.f32 %v1467, %v1555
    %v1557 = vpop.f32.mrf.mxu0
    %v1558 = vadd.f32 %v1469, %v1557
    %1559 = vmatmul.bf16.gmra.mxu0 %v664
    %v1560 = vpop.f32.mrf.mxu0
    %v1561 = vadd.f32 %v1472, %v1560
    %v1562 = vpop.f32.mrf.mxu0
    %v1563 = vadd.f32 %v1474, %v1562
    %1564 = vmatmul.bf16.gmra.mxu0 %v671
    %v1565 = vpop.f32.mrf.mxu0
    %v1566 = vadd.f32 %v1477, %v1565
    %v1567 = vpop.f32.mrf.mxu0
    %v1568 = vadd.f32 %v1479, %v1567
    %1569 = vmatmul.bf16.gmra.mxu0 %v678
    %v1570 = vpop.f32.mrf.mxu0
    %v1571 = vadd.f32 %v1482, %v1570
    %v1572 = vpop.f32.mrf.mxu0
    %v1573 = vadd.f32 %v1484, %v1572
    %1574 = vmatmul.bf16.gmra.mxu0 %v685
    %v1575 = vpop.f32.mrf.mxu0
    %v1576 = vadd.f32 %v1487, %v1575
    %v1577 = vpop.f32.mrf.mxu0
    %v1578 = vadd.f32 %v1489, %v1577
    %1579 = vmatmul.bf16.gmra.mxu0 %v692
    %v1580 = vpop.f32.mrf.mxu0
    %v1581 = vadd.f32 %v1492, %v1580
    %v1582 = vpop.f32.mrf.mxu0
    %v1583 = vadd.f32 %v1494, %v1582
    %1584 = vmatmul.bf16.gmra.mxu0 %v699
    %v1585 = vpop.f32.mrf.mxu0
    %v1586 = vadd.f32 %v1497, %v1585
    %v1587 = vpop.f32.mrf.mxu0
    %v1588 = vadd.f32 %v1499, %v1587
    %1589 = vmatmul.bf16.gmra.mxu0 %v706
    %v1590 = vpop.f32.mrf.mxu0
    %v1591 = vadd.f32 %v1502, %v1590
    %v1592 = vpop.f32.mrf.mxu0
    %v1593 = vadd.f32 %v1504, %v1592
    %1594 = vmatmul.bf16.gmra.mxu0 %v713
    %v1595 = vpop.f32.mrf.mxu0
    %v1596 = vadd.f32 %v1507, %v1595
    %v1597 = vpop.f32.mrf.mxu0
    %v1598 = vadd.f32 %v1509, %v1597
    %1599 = vdwg.mxu0
    %1600 = vmatpush.bf16.msra.mxu0 %v1055
    %1601 = vmatpush.bf16.msra.mxu0 %v1054
    %1602 = vmatpush.bf16.msra.mxu0 %v1053
    %1603 = vmatpush.bf16.msra.mxu0 %v1052
    %1604 = vmatpush.bf16.msra.mxu0 %v1051
    %1605 = vmatpush.bf16.msra.mxu0 %v1050
    %1606 = vmatpush.bf16.msra.mxu0 %v1049
    %1607 = vmatpush.bf16.msra.mxu0 %v1048
    %1608 = vmatmul.bf16.gmra.mxu0 %v609
    %v1609 = vpop.f32.mrf.mxu0
    %v1610 = vadd.f32 %v1521, %v1609
    %v1611 = vpop.f32.mrf.mxu0
    %v1612 = vadd.f32 %v1523, %v1611
    %1613 = vmatmul.bf16.gmra.mxu0 %v616
    %v1614 = vpop.f32.mrf.mxu0
    %v1615 = vadd.f32 %v1526, %v1614
    %v1616 = vpop.f32.mrf.mxu0
    %v1617 = vadd.f32 %v1528, %v1616
    %1618 = vmatmul.bf16.gmra.mxu0 %v623
    %v1619 = vpop.f32.mrf.mxu0
    %v1620 = vadd.f32 %v1531, %v1619
    %v1621 = vpop.f32.mrf.mxu0
    %v1622 = vadd.f32 %v1533, %v1621
    %1623 = vmatmul.bf16.gmra.mxu0 %v630
    %v1624 = vpop.f32.mrf.mxu0
    %v1625 = vadd.f32 %v1536, %v1624
    %v1626 = vpop.f32.mrf.mxu0
    %v1627 = vadd.f32 %v1538, %v1626
    %1628 = vmatmul.bf16.gmra.mxu0 %v637
    %v1629 = vpop.f32.mrf.mxu0
    %v1630 = vadd.f32 %v1541, %v1629
    %v1631 = vpop.f32.mrf.mxu0
    %v1632 = vadd.f32 %v1543, %v1631
    %1633 = vmatmul.bf16.gmra.mxu0 %v644
    %v1634 = vpop.f32.mrf.mxu0
    %v1635 = vadd.f32 %v1546, %v1634
    %v1636 = vpop.f32.mrf.mxu0
    %v1637 = vadd.f32 %v1548, %v1636
    %1638 = vmatmul.bf16.gmra.mxu0 %v651
    %v1639 = vpop.f32.mrf.mxu0
    %v1640 = vadd.f32 %v1551, %v1639
    %v1641 = vpop.f32.mrf.mxu0
    %v1642 = vadd.f32 %v1553, %v1641
    %1643 = vmatmul.bf16.gmra.mxu0 %v658
    %v1644 = vpop.f32.mrf.mxu0
    %v1645 = vadd.f32 %v1556, %v1644
    %v1646 = vpop.f32.mrf.mxu0
    %v1647 = vadd.f32 %v1558, %v1646
    %1648 = vmatmul.bf16.gmra.mxu0 %v665
    %v1649 = vpop.f32.mrf.mxu0
    %v1650 = vadd.f32 %v1561, %v1649
    %v1651 = vpop.f32.mrf.mxu0
    %v1652 = vadd.f32 %v1563, %v1651
    %1653 = vmatmul.bf16.gmra.mxu0 %v672
    %v1654 = vpop.f32.mrf.mxu0
    %v1655 = vadd.f32 %v1566, %v1654
    %v1656 = vpop.f32.mrf.mxu0
    %v1657 = vadd.f32 %v1568, %v1656
    %1658 = vmatmul.bf16.gmra.mxu0 %v679
    %v1659 = vpop.f32.mrf.mxu0
    %v1660 = vadd.f32 %v1571, %v1659
    %v1661 = vpop.f32.mrf.mxu0
    %v1662 = vadd.f32 %v1573, %v1661
    %1663 = vmatmul.bf16.gmra.mxu0 %v686
    %v1664 = vpop.f32.mrf.mxu0
    %v1665 = vadd.f32 %v1576, %v1664
    %v1666 = vpop.f32.mrf.mxu0
    %v1667 = vadd.f32 %v1578, %v1666
    %1668 = vmatmul.bf16.gmra.mxu0 %v693
    %v1669 = vpop.f32.mrf.mxu0
    %v1670 = vadd.f32 %v1581, %v1669
    %v1671 = vpop.f32.mrf.mxu0
    %v1672 = vadd.f32 %v1583, %v1671
    %1673 = vmatmul.bf16.gmra.mxu0 %v700
    %v1674 = vpop.f32.mrf.mxu0
    %v1675 = vadd.f32 %v1586, %v1674
    %v1676 = vpop.f32.mrf.mxu0
    %v1677 = vadd.f32 %v1588, %v1676
    %1678 = vmatmul.bf16.gmra.mxu0 %v707
    %v1679 = vpop.f32.mrf.mxu0
    %v1680 = vadd.f32 %v1591, %v1679
    %v1681 = vpop.f32.mrf.mxu0
    %v1682 = vadd.f32 %v1593, %v1681
    %1683 = vmatmul.bf16.gmra.mxu0 %v714
    %v1684 = vpop.f32.mrf.mxu0
    %v1685 = vadd.f32 %v1596, %v1684
    %v1686 = vpop.f32.mrf.mxu0
    %v1687 = vadd.f32 %v1598, %v1686
    %1688 = vdwg.mxu0
    %1689 = vmatpush.bf16.msra.mxu0 0
    %1690 = vmatpush.bf16.msra.mxu0 0
    %1691 = vmatpush.bf16.msra.mxu0 0
    %1692 = vmatpush.bf16.msra.mxu0 0
    %1693 = vmatpush.bf16.msra.mxu0 0
    %1694 = vmatpush.bf16.msra.mxu0 0
    %1695 = vmatpush.bf16.msra.mxu0 0
    %1696 = vmatpush.bf16.msra.mxu0 %v1056
    %1697 = vmatmul.bf16.gmra.mxu0 %v1108
    %v1698 = vpop.f32.mrf.mxu0
    %v1699 = vadd.f32 %v1610, %v1698
    %v1700 = vpop.f32.mrf.mxu0
    %v1701 = vadd.f32 %v1612, %v1700
    %1702 = vmatmul.bf16.gmra.mxu0 %v1111
    %v1703 = vpop.f32.mrf.mxu0
    %v1704 = vadd.f32 %v1615, %v1703
    %v1705 = vpop.f32.mrf.mxu0
    %v1706 = vadd.f32 %v1617, %v1705
    %1707 = vmatmul.bf16.gmra.mxu0 %v1114
    %v1708 = vpop.f32.mrf.mxu0
    %v1709 = vadd.f32 %v1620, %v1708
    %v1710 = vpop.f32.mrf.mxu0
    %v1711 = vadd.f32 %v1622, %v1710
    %1712 = vmatmul.bf16.gmra.mxu0 %v1117
    %v1713 = vpop.f32.mrf.mxu0
    %v1714 = vadd.f32 %v1625, %v1713
    %v1715 = vpop.f32.mrf.mxu0
    %v1716 = vadd.f32 %v1627, %v1715
    %1717 = vmatmul.bf16.gmra.mxu0 %v1120
    %v1718 = vpop.f32.mrf.mxu0
    %v1719 = vadd.f32 %v1630, %v1718
    %v1720 = vpop.f32.mrf.mxu0
    %v1721 = vadd.f32 %v1632, %v1720
    %1722 = vmatmul.bf16.gmra.mxu0 %v1123
    %v1723 = vpop.f32.mrf.mxu0
    %v1724 = vadd.f32 %v1635, %v1723
    %v1725 = vpop.f32.mrf.mxu0
    %v1726 = vadd.f32 %v1637, %v1725
    %1727 = vmatmul.bf16.gmra.mxu0 %v1126
    %v1728 = vpop.f32.mrf.mxu0
    %v1729 = vadd.f32 %v1640, %v1728
    %v1730 = vpop.f32.mrf.mxu0
    %v1731 = vadd.f32 %v1642, %v1730
    %1732 = vmatmul.bf16.gmra.mxu0 %v1129
    %v1733 = vpop.f32.mrf.mxu0
    %v1734 = vadd.f32 %v1645, %v1733
    %v1735 = vpop.f32.mrf.mxu0
    %v1736 = vadd.f32 %v1647, %v1735
    %1737 = vmatmul.bf16.gmra.mxu0 %v1132
    %v1738 = vpop.f32.mrf.mxu0
    %v1739 = vadd.f32 %v1650, %v1738
    %v1740 = vpop.f32.mrf.mxu0
    %v1741 = vadd.f32 %v1652, %v1740
    %1742 = vmatmul.bf16.gmra.mxu0 %v1135
    %v1743 = vpop.f32.mrf.mxu0
    %v1744 = vadd.f32 %v1655, %v1743
    %v1745 = vpop.f32.mrf.mxu0
    %v1746 = vadd.f32 %v1657, %v1745
    %1747 = vmatmul.bf16.gmra.mxu0 %v1138
    %v1748 = vpop.f32.mrf.mxu0
    %v1749 = vadd.f32 %v1660, %v1748
    %v1750 = vpop.f32.mrf.mxu0
    %v1751 = vadd.f32 %v1662, %v1750
    %1752 = vmatmul.bf16.gmra.mxu0 %v1141
    %v1753 = vpop.f32.mrf.mxu0
    %v1754 = vadd.f32 %v1665, %v1753
    %v1755 = vpop.f32.mrf.mxu0
    %v1756 = vadd.f32 %v1667, %v1755
    %1757 = vmatmul.bf16.gmra.mxu0 %v1144
    %v1758 = vpop.f32.mrf.mxu0
    %v1759 = vadd.f32 %v1670, %v1758
    %v1760 = vpop.f32.mrf.mxu0
    %v1761 = vadd.f32 %v1672, %v1760
    %1762 = vmatmul.bf16.gmra.mxu0 %v1147
    %v1763 = vpop.f32.mrf.mxu0
    %v1764 = vadd.f32 %v1675, %v1763
    %v1765 = vpop.f32.mrf.mxu0
    %v1766 = vadd.f32 %v1677, %v1765
    %1767 = vmatmul.bf16.gmra.mxu0 %v1150
    %v1768 = vpop.f32.mrf.mxu0
    %v1769 = vadd.f32 %v1680, %v1768
    %v1770 = vpop.f32.mrf.mxu0
    %v1771 = vadd.f32 %v1682, %v1770
    %1772 = vmatmul.bf16.gmra.mxu0 %v1153
    %v1773 = vpop.f32.mrf.mxu0
    %v1774 = vadd.f32 %v1685, %v1773
    %v1775 = vpop.f32.mrf.mxu0
    %v1776 = vadd.f32 %v1687, %v1775
    %1777 = vdwg.mxu0
    %v1778 = vmax.f32 %v1699, 0.0
    %v1779 = vmax.f32 %v1701, 0.0
    %v1780 = vmax.f32 %v1704, 0.0
    %v1781 = vmax.f32 %v1706, 0.0
    %v1782 = vmax.f32 %v1709, 0.0
    %v1783 = vmax.f32 %v1711, 0.0
    %v1784 = vmax.f32 %v1714, 0.0
    %v1785 = vmax.f32 %v1716, 0.0
    %v1786 = vmax.f32 %v1719, 0.0
    %v1787 = vmax.f32 %v1721, 0.0
    %v1788 = vmax.f32 %v1724, 0.0
    %v1789 = vmax.f32 %v1726, 0.0
    %v1790 = vmax.f32 %v1729, 0.0
    %v1791 = vmax.f32 %v1731, 0.0
    %v1792 = vmax.f32 %v1734, 0.0
    %v1793 = vmax.f32 %v1736, 0.0
    %v1794 = vmax.f32 %v1739, 0.0
    %v1795 = vmax.f32 %v1741, 0.0
    %v1796 = vmax.f32 %v1744, 0.0
    %v1797 = vmax.f32 %v1746, 0.0
    %v1798 = vmax.f32 %v1749, 0.0
    %v1799 = vmax.f32 %v1751, 0.0
    %v1800 = vmax.f32 %v1754, 0.0
    %v1801 = vmax.f32 %v1756, 0.0
    %v1802 = vmax.f32 %v1759, 0.0
    %v1803 = vmax.f32 %v1761, 0.0
    %v1804 = vmax.f32 %v1764, 0.0
    %v1805 = vmax.f32 %v1766, 0.0
    %v1806 = vmax.f32 %v1769, 0.0
    %v1807 = vmax.f32 %v1771, 0.0
    %v1808 = vmax.f32 %v1774, 0.0
    %v1809 = vmax.f32 %v1776, 0.0
    %v1810 = vpack.c.bf16 %v1779, %v1778
    %v1811 = vpack.c.bf16 %v1781, %v1780
    %v1812 = vpack.c.bf16 %v1783, %v1782
    %v1813 = vpack.c.bf16 %v1785, %v1784
    %v1814 = vpack.c.bf16 %v1787, %v1786
    %v1815 = vpack.c.bf16 %v1789, %v1788
    %v1816 = vpack.c.bf16 %v1791, %v1790
    %v1817 = vpack.c.bf16 %v1793, %v1792
    %v1818 = vpack.c.bf16 %v1795, %v1794
    %v1819 = vpack.c.bf16 %v1797, %v1796
    %v1820 = vpack.c.bf16 %v1799, %v1798
    %v1821 = vpack.c.bf16 %v1801, %v1800
    %v1822 = vpack.c.bf16 %v1803, %v1802
    %v1823 = vpack.c.bf16 %v1805, %v1804
    %v1824 = vpack.c.bf16 %v1807, %v1806
    %v1825 = vpack.c.bf16 %v1809, %v1808
    %v1826 = vld [vmem:[%s3] sm:$0xf]
    %v1827 = vld [vmem:[%s3 + $0x4] sm:$0xf]
    %v1828 = vld [vmem:[%s3 + $0x8] sm:$0xf]
    %v1829 = vld [vmem:[%s3 + $0xc] sm:$0xf]
    %v1830 = vld [vmem:[%s3 + $0x10] sm:$0xf]
    %v1831 = vld [vmem:[%s3 + $0x14] sm:$0xf]
    %v1832 = vld [vmem:[%s3 + $0x18] sm:$0xf]
    %v1833 = vld [vmem:[%s3 + $0x1c] sm:$0xf]
    %v1834 = vld [vmem:[%s3 + $0x20] sm:$0xf]
    %v1835 = vld [vmem:[%s3 + $0x24] sm:$0xf]
    %v1836 = vld [vmem:[%s3 + $0x28] sm:$0xf]
    %v1837 = vld [vmem:[%s3 + $0x2c] sm:$0xf]
    %v1838 = vld [vmem:[%s3 + $0x30] sm:$0xf]
    %v1839 = vld [vmem:[%s3 + $0x34] sm:$0xf]
    %v1840 = vld [vmem:[%s3 + $0x38] sm:$0xf]
    %v1841 = vld [vmem:[%s3 + $0x3c] sm:$0xf]
    %v1842 = vld [vmem:[%s4] sm:$0x1]
    %v1844 = vperm.slane %v1842, 0
    %v1862 = vunpack.c.l.b16 %v1826
    %v1863 = vunpack.c.l.b16 %v1827
    %v1864 = vunpack.c.l.b16 %v1828
    %v1865 = vunpack.c.l.b16 %v1829
    %v1866 = vunpack.c.l.b16 %v1830
    %v1867 = vunpack.c.l.b16 %v1831
    %v1868 = vunpack.c.l.b16 %v1832
    %v1869 = vunpack.c.l.b16 %v1833
    %v1870 = vunpack.c.l.b16 %v1834
    %v1871 = vunpack.c.l.b16 %v1835
    %v1872 = vunpack.c.l.b16 %v1836
    %v1873 = vunpack.c.l.b16 %v1837
    %v1874 = vunpack.c.l.b16 %v1838
    %v1875 = vunpack.c.l.b16 %v1839
    %v1876 = vunpack.c.l.b16 %v1840
    %v1877 = vunpack.c.l.b16 %v1841
    %v1878 = vpack.c.b16 %v1863, %v1862
    %v1879 = vpack.c.b16 %v1865, %v1864
    %v1880 = vpack.c.b16 %v1867, %v1866
    %v1881 = vpack.c.b16 %v1869, %v1868
    %v1882 = vpack.c.b16 %v1871, %v1870
    %v1883 = vpack.c.b16 %v1873, %v1872
    %v1884 = vpack.c.b16 %v1875, %v1874
    %v1885 = vpack.c.b16 %v1877, %v1876
    %1894 = vmatpush.bf16.msra.mxu0 %v1885
    %1895 = vmatpush.bf16.msra.mxu0 %v1884
    %1896 = vmatpush.bf16.msra.mxu0 %v1883
    %1897 = vmatpush.bf16.msra.mxu0 %v1882
    %1898 = vmatpush.bf16.msra.mxu0 %v1881
    %1899 = vmatpush.bf16.msra.mxu0 %v1880
    %1900 = vmatpush.bf16.msra.mxu0 %v1879
    %1901 = vmatpush.bf16.msra.mxu0 %v1878
    %1902 = vmatmul.bf16.gmra.mxu0 %v1810
    %v1903 = vpop.f32.mrf.mxu0
    %v1904 = vadd.f32 %v1844, %v1903
    %v1905 = vpop.f32.mrf.mxu0
    %v1906 = vadd.f32 %v1844, %v1905
    %1907 = vmatmul.bf16.gmra.mxu0 %v1811
    %v1908 = vpop.f32.mrf.mxu0
    %v1909 = vadd.f32 %v1844, %v1908
    %v1910 = vpop.f32.mrf.mxu0
    %v1911 = vadd.f32 %v1844, %v1910
    %1912 = vmatmul.bf16.gmra.mxu0 %v1812
    %v1913 = vpop.f32.mrf.mxu0
    %v1914 = vadd.f32 %v1844, %v1913
    %v1915 = vpop.f32.mrf.mxu0
    %v1916 = vadd.f32 %v1844, %v1915
    %1917 = vmatmul.bf16.gmra.mxu0 %v1813
    %v1918 = vpop.f32.mrf.mxu0
    %v1919 = vadd.f32 %v1844, %v1918
    %v1920 = vpop.f32.mrf.mxu0
    %v1921 = vadd.f32 %v1844, %v1920
    %1922 = vmatmul.bf16.gmra.mxu0 %v1814
    %v1923 = vpop.f32.mrf.mxu0
    %v1924 = vadd.f32 %v1844, %v1923
    %v1925 = vpop.f32.mrf.mxu0
    %v1926 = vadd.f32 %v1844, %v1925
    %1927 = vmatmul.bf16.gmra.mxu0 %v1815
    %v1928 = vpop.f32.mrf.mxu0
    %v1929 = vadd.f32 %v1844, %v1928
    %v1930 = vpop.f32.mrf.mxu0
    %v1931 = vadd.f32 %v1844, %v1930
    %1932 = vmatmul.bf16.gmra.mxu0 %v1816
    %v1933 = vpop.f32.mrf.mxu0
    %v1934 = vadd.f32 %v1844, %v1933
    %v1935 = vpop.f32.mrf.mxu0
    %v1936 = vadd.f32 %v1844, %v1935
    %1937 = vmatmul.bf16.gmra.mxu0 %v1817
    %v1938 = vpop.f32.mrf.mxu0
    %v1939 = vadd.f32 %v1844, %v1938
    %v1940 = vpop.f32.mrf.mxu0
    %v1941 = vadd.f32 %v1844, %v1940
    %1942 = vmatmul.bf16.gmra.mxu0 %v1818
    %v1943 = vpop.f32.mrf.mxu0
    %v1944 = vadd.f32 %v1844, %v1943
    %v1945 = vpop.f32.mrf.mxu0
    %v1946 = vadd.f32 %v1844, %v1945
    %1947 = vmatmul.bf16.gmra.mxu0 %v1819
    %v1948 = vpop.f32.mrf.mxu0
    %v1949 = vadd.f32 %v1844, %v1948
    %v1950 = vpop.f32.mrf.mxu0
    %v1951 = vadd.f32 %v1844, %v1950
    %1952 = vmatmul.bf16.gmra.mxu0 %v1820
    %v1953 = vpop.f32.mrf.mxu0
    %v1954 = vadd.f32 %v1844, %v1953
    %v1955 = vpop.f32.mrf.mxu0
    %v1956 = vadd.f32 %v1844, %v1955
    %1957 = vmatmul.bf16.gmra.mxu0 %v1821
    %v1958 = vpop.f32.mrf.mxu0
    %v1959 = vadd.f32 %v1844, %v1958
    %v1960 = vpop.f32.mrf.mxu0
    %v1961 = vadd.f32 %v1844, %v1960
    %1962 = vmatmul.bf16.gmra.mxu0 %v1822
    %v1963 = vpop.f32.mrf.mxu0
    %v1964 = vadd.f32 %v1844, %v1963
    %v1965 = vpop.f32.mrf.mxu0
    %v1966 = vadd.f32 %v1844, %v1965
    %1967 = vmatmul.bf16.gmra.mxu0 %v1823
    %v1968 = vpop.f32.mrf.mxu0
    %v1969 = vadd.f32 %v1844, %v1968
    %v1970 = vpop.f32.mrf.mxu0
    %v1971 = vadd.f32 %v1844, %v1970
    %1972 = vmatmul.bf16.gmra.mxu0 %v1824
    %v1973 = vpop.f32.mrf.mxu0
    %v1974 = vadd.f32 %v1844, %v1973
    %v1975 = vpop.f32.mrf.mxu0
    %v1976 = vadd.f32 %v1844, %v1975
    %1977 = vmatmul.bf16.gmra.mxu0 %v1825
    %v1978 = vpop.f32.mrf.mxu0
    %v1979 = vadd.f32 %v1844, %v1978
    %v1980 = vpop.f32.mrf.mxu0
    %v1981 = vadd.f32 %v1844, %v1980
    %1982 = vdwg.mxu0
    %v1983 = vpack.c.bf16 %v1904, %v1904
    %v1984 = vpack.c.bf16 %v1906, %v1906
    %v1985 = vpack.c.bf16 %v1909, %v1909
    %v1986 = vpack.c.bf16 %v1911, %v1911
    %v1987 = vpack.c.bf16 %v1914, %v1914
    %v1988 = vpack.c.bf16 %v1916, %v1916
    %v1989 = vpack.c.bf16 %v1919, %v1919
    %v1990 = vpack.c.bf16 %v1921, %v1921
    %v1991 = vpack.c.bf16 %v1924, %v1924
    %v1992 = vpack.c.bf16 %v1926, %v1926
    %v1993 = vpack.c.bf16 %v1929, %v1929
    %v1994 = vpack.c.bf16 %v1931, %v1931
    %v1995 = vpack.c.bf16 %v1934, %v1934
    %v1996 = vpack.c.bf16 %v1936, %v1936
    %v1997 = vpack.c.bf16 %v1939, %v1939
    %v1998 = vpack.c.bf16 %v1941, %v1941
    %v1999 = vpack.c.bf16 %v1944, %v1944
    %v2000 = vpack.c.bf16 %v1946, %v1946
    %v2001 = vpack.c.bf16 %v1949, %v1949
    %v2002 = vpack.c.bf16 %v1951, %v1951
    %v2003 = vpack.c.bf16 %v1954, %v1954
    %v2004 = vpack.c.bf16 %v1956, %v1956
    %v2005 = vpack.c.bf16 %v1959, %v1959
    %v2006 = vpack.c.bf16 %v1961, %v1961
    %v2007 = vpack.c.bf16 %v1964, %v1964
    %v2008 = vpack.c.bf16 %v1966, %v1966
    %v2009 = vpack.c.bf16 %v1969, %v1969
    %v2010 = vpack.c.bf16 %v1971, %v1971
    %v2011 = vpack.c.bf16 %v1974, %v1974
    %v2012 = vpack.c.bf16 %v1976, %v1976
    %v2013 = vpack.c.bf16 %v1979, %v1979
    %v2014 = vpack.c.bf16 %v1981, %v1981
    %2015 = vst [vmem:[#allocation2] sm:$0xf] %v1983
    %2016 = vst [vmem:[#allocation2 + $0x4] sm:$0xf] %v1984
    %2017 = vst [vmem:[#allocation2 + $0x8] sm:$0xf] %v1985
    %2018 = vst [vmem:[#allocation2 + $0xc] sm:$0xf] %v1986
    %2019 = vst [vmem:[#allocation2 + $0x10] sm:$0xf] %v1987
    %2020 = vst [vmem:[#allocation2 + $0x14] sm:$0xf] %v1988
    %2021 = vst [vmem:[#allocation2 + $0x18] sm:$0xf] %v1989
    %2022 = vst [vmem:[#allocation2 + $0x1c] sm:$0xf] %v1990
    %2023 = vst [vmem:[#allocation2 + $0x20] sm:$0xf] %v1991
    %2024 = vst [vmem:[#allocation2 + $0x24] sm:$0xf] %v1992
    %2025 = vst [vmem:[#allocation2 + $0x28] sm:$0xf] %v1993
    %2026 = vst [vmem:[#allocation2 + $0x2c] sm:$0xf] %v1994
    %2027 = vst [vmem:[#allocation2 + $0x30] sm:$0xf] %v1995
    %2028 = vst [vmem:[#allocation2 + $0x34] sm:$0xf] %v1996
    %2029 = vst [vmem:[#allocation2 + $0x38] sm:$0xf] %v1997
    %2030 = vst [vmem:[#allocation2 + $0x3c] sm:$0xf] %v1998
    %2031 = vst [vmem:[#allocation2 + $0x40] sm:$0xf] %v1999
    %2032 = vst [vmem:[#allocation2 + $0x44] sm:$0xf] %v2000
    %2033 = vst [vmem:[#allocation2 + $0x48] sm:$0xf] %v2001
    %2034 = vst [vmem:[#allocation2 + $0x4c] sm:$0xf] %v2002
    %2035 = vst [vmem:[#allocation2 + $0x50] sm:$0xf] %v2003
    %2036 = vst [vmem:[#allocation2 + $0x54] sm:$0xf] %v2004
    %2037 = vst [vmem:[#allocation2 + $0x58] sm:$0xf] %v2005
    %2038 = vst [vmem:[#allocation2 + $0x5c] sm:$0xf] %v2006
    %2039 = vst [vmem:[#allocation2 + $0x60] sm:$0xf] %v2007
    %2040 = vst [vmem:[#allocation2 + $0x64] sm:$0xf] %v2008
    %2041 = vst [vmem:[#allocation2 + $0x68] sm:$0xf] %v2009
    %2042 = vst [vmem:[#allocation2 + $0x6c] sm:$0xf] %v2010
    %2043 = vst [vmem:[#allocation2 + $0x70] sm:$0xf] %v2011
    %2044 = vst [vmem:[#allocation2 + $0x74] sm:$0xf] %v2012
    %2045 = vst [vmem:[#allocation2 + $0x78] sm:$0xf] %v2013
    %2046 = vst [vmem:[#allocation2 + $0x7c] sm:$0xf] %v2014
    // Predicated region
    $region22: #{tpu_custom_call.1} parent=1 // pred_check
      _
    $region23: #{tpu_custom_call.1} parent=1 // pred_check_branch
      %2048 = sbr.rel (0) target = $region25
    $region24: #{tpu_custom_call.1} parent=1 // pred_region
      %2050 = vsyncadd [#allocation3], 0
      %s2051 = sshll.u32 [#allocation2], 4
      %s2052 = int_to_ptr.vmem [resolvable:$true] %s2051
      %s2053 = sshll.u32 %s5, 4
      %s2054 = int_to_ptr.hbm [resolvable:$true] %s2053
      %2059 = dma.vmem_to_hbm [thread:$0]  %s2052, 2048, %s2054, [#allocation3], 64, 64, 4
    $region25: #{tpu_custom_call.1} parent=1 // pred_fallthru
      _
    // Predicated region
    $region26: #{tpu_custom_call.1} parent=1 // pred_check
      _
    $region27: #{tpu_custom_call.1} parent=1 // pred_check_branch
      %2061 = sbr.rel (0) target = $region29
    $region28: #{tpu_custom_call.1} parent=1 // pred_region
      %2063 = dma.done [#allocation3], 2048
    $region29: #{tpu_custom_call.1} parent=1 // pred_fallthru
      _
    %2064 = vsyncpa [#allocation3], 1

</llo_original>
